<compile_context>
chip_gen: v6e
topology: v6e:2x2x1
jax: 0.10.0
libtpu: 0.0.40
codegen_flags: <defaults>
</compile_context>

<pallas_src>
import jax
import jax.numpy as jnp
from jax.experimental import pallas as pl
from jax.experimental.pallas import tpu as pltpu


def _round_up(x, m):
    return ((x + m - 1) // m) * m


def _pick_block_b(B, align):
    """Batch tile: big enough to amortize per-step overhead (~0.35us), small enough
    that the grid has >=2 steps (pipelining + megacore sharding)."""
    target = 256
    if B <= align:
        return align
    bb = min(target, _round_up(B, align) // 2)
    return max(align, (bb // align) * align)


def mlp_head_kernel(x_ref, w1_ref, b1_ref, w2_ref, b2_ref, w3_ref, b3_ref,
                    o_ref, h_ref):
    # Layers 1-2 are only recomputed when the output-column tile index resets, so
    # tiling w3/out over a large out_dim does not redo the hidden-layer matmuls.
    @pl.when(pl.program_id(1) == 0)
    def _():
        h = jnp.dot(x_ref[...], w1_ref[...], preferred_element_type=jnp.float32)
        h = jnp.maximum(h + b1_ref[...], 0.0)                      # bias + ReLU in f32 (VPU)
        h = jnp.dot(h.astype(w2_ref.dtype), w2_ref[...],
                    preferred_element_type=jnp.float32)
        h = jnp.maximum(h + b2_ref[...], 0.0)
        h_ref[...] = h.astype(h_ref.dtype)                         # bf16 feed for layer-3 MXU

    out = jnp.dot(h_ref[...], w3_ref[...], preferred_element_type=jnp.float32)
    o_ref[...] = (out + b3_ref[...]).astype(o_ref.dtype)


def _build_mlp_head_call(*, block_b, block_n, Bp, out_pad, in_dim, h0, h1,
                         x_dtype, compute_dtype, single_buffer_weights,
                         cost_estimate, vmem_limit_bytes):
    grid = (Bp // block_b, out_pad // block_n)

    resident_kwargs = {}
    if single_buffer_weights and hasattr(pl, "Buffered"):
        # Constant index_map across the whole grid: fetched once, never re-DMAed,
        # so double-buffering would only waste VMEM.
        resident_kwargs = dict(pipeline_mode=pl.Buffered(1))

    def const2d(shape):
        return pl.BlockSpec(shape, lambda i, j: (0, 0), **resident_kwargs)

    in_specs = [
        pl.BlockSpec((block_b, in_dim), lambda i, j: (i, 0)),   # x: batch-tiled
        const2d((in_dim, h0)),                                  # w1 (resident)
        const2d((1, h0)),                                       # b1 (f32)
        const2d((h0, h1)),                                      # w2 (resident)
        const2d((1, h1)),                                       # b2 (f32)
        pl.BlockSpec((h1, block_n), lambda i, j: (0, j)),       # w3: column-tiled
        pl.BlockSpec((1, block_n), lambda i, j: (0, j)),        # b3: column-tiled (f32)
    ]
    out_spec = pl.BlockSpec((block_b, block_n), lambda i, j: (i, j))  # lane-dense (128-mult)

    return pl.pallas_call(
        mlp_head_kernel,
        out_shape=jax.ShapeDtypeStruct((Bp, out_pad), x_dtype),
        grid_spec=pltpu.PrefetchScalarGridSpec(
            num_scalar_prefetch=0,
            grid=grid,
            in_specs=in_specs,
            out_specs=out_spec,
            scratch_shapes=[pltpu.VMEM((block_b, h1), compute_dtype)],  # cached hidden acts
        ),
        compiler_params=pltpu.CompilerParams(
            dimension_semantics=("parallel", "arbitrary"),
            vmem_limit_bytes=vmem_limit_bytes,
        ),
        cost_estimate=cost_estimate,
    )


def mlp_head(x, params, *, block_b=None, block_n=None, compute_dtype=jnp.bfloat16):
    """x: (B, in_dim) float32; params: dict with w1,b1,w2,b2,w3,b3 (f32)."""
    B, in_dim = x.shape
    w1, b1 = params["w1"], params["b1"]
    w2, b2 = params["w2"], params["b2"]
    w3, b3 = params["w3"], params["b3"]
    h0, h1, out_dim = w1.shape[1], w2.shape[1], w3.shape[1]

    csize = jnp.dtype(compute_dtype).itemsize
    align = 16 if csize < 4 else 8                    # sublane alignment (bf16 packs 16 rows)

    if block_b is None:
        block_b = _pick_block_b(B, align)
    block_b = max(align, (int(block_b) // align) * align)
    Bp = _round_up(B, block_b)

    # Lane-dense output: pad out_dim to a multiple of 128; tile columns if very wide.
    out_pad = _round_up(out_dim, 128)
    if block_n is None:
        block_n = min(out_pad, 2048)
    block_n = _round_up(int(block_n), 128)
    out_pad = _round_up(out_pad, block_n)

    # Zero-pad batch rows / output columns (padding never leaks into the valid region).
    xp = x if Bp == B else jnp.pad(x, ((0, Bp - B), (0, 0)))
    w3p = w3 if out_pad == out_dim else jnp.pad(w3, ((0, 0), (0, out_pad - out_dim)))
    b3p = b3 if out_pad == out_dim else jnp.pad(b3, ((0, 0), (0, out_pad - out_dim)))

    # bf16 matmul operands; biases (and epilogue math) stay f32.
    xc = xp.astype(compute_dtype)
    w1c, w2c, w3c = (w.astype(compute_dtype) for w in (w1, w2, w3p))
    b1f, b2f, b3f = (b.astype(jnp.float32) for b in (b1, b2, b3p))

    flops = 2 * B * (in_dim * h0 + h0 * h1 + h1 * out_dim)
    bytes_accessed = (xp.size * csize
                      + (w1.size + w2.size + w3p.size) * csize
                      + (b1.size + b2.size + b3p.size) * 4
                      + Bp * out_pad * x.dtype.itemsize)
    cost = pl.CostEstimate(flops=flops, transcendentals=0, bytes_accessed=bytes_accessed)

    # VMEM footprint estimate (double-buffered streaming tiles, single-buffered weights).
    vmem_est = (2 * block_b * in_dim * csize               # x tile
                + (w1.size + w2.size) * csize              # resident w1/w2
                + 2 * (h1 + 1) * block_n * csize           # w3/b3 column tiles
                + (b1.size + b2.size) * 4
                + 2 * block_b * block_n * x.dtype.itemsize  # out tile
                + block_b * h1 * csize                     # h scratch
                + block_b * max(h0, h1) * 4)               # live f32 intermediate
    # Cap at 64 MiB (v7x physical VMEM); floor at 32 MiB.
    vmem_limit = int(min(max(vmem_est * 5 // 4 + (2 << 20), 32 << 20), 64 << 20))

    build_kwargs = dict(block_b=block_b, block_n=block_n, Bp=Bp, out_pad=out_pad,
                        in_dim=in_dim, h0=h0, h1=h1, x_dtype=x.dtype,
                        compute_dtype=compute_dtype, cost_estimate=cost,
                        vmem_limit_bytes=vmem_limit)
    args = (xc, w1c, b1f, w2c, b2f, w3c, b3f)
    try:
        out_p = _build_mlp_head_call(single_buffer_weights=True, **build_kwargs)(*args)
        out_p = jax.block_until_ready(out_p)   # surface any async failure inside the guard
    except Exception:
        # Fallback if this JAX build rejects single-buffered (pipeline_mode) BlockSpecs.
        out_p = _build_mlp_head_call(single_buffer_weights=False, **build_kwargs)(*args)

    return out_p[:B, :out_dim]


def init_params(key, in_dim, hidden_dims, out_dim, std=0.02):
    """Mirror PyTorch trunc_normal_(std=0.02) (truncation at +/-2 absolute), bias=0."""
    dims = [in_dim] + list(hidden_dims) + [out_dim]
    params = {}
    for li in range(len(dims) - 1):
        key, sub = jax.random.split(key)
        d_in, d_out = dims[li], dims[li + 1]
        w = jax.random.truncated_normal(
            sub, -2.0 / std, 2.0 / std, (d_in, d_out), jnp.float32) * std
        params[f"w{li + 1}"] = w
        params[f"b{li + 1}"] = jnp.zeros((1, d_out), jnp.float32)
    return params


def mlp_head_ref(x, params):
    h = jnp.maximum(x @ params["w1"] + params["b1"], 0.0)
    h = jnp.maximum(h @ params["w2"] + params["b2"], 0.0)
    return h @ params["w3"] + params["b3"]


if __name__ == "__main__":
    # Small but tiling-exercising shapes: batch tiled into 2 grid steps (block_b=16),
    # out_dim=48 exercises the lane-dense pad-to-128 + slice path.
    in_dim, hidden_dims, out_dim = 64, [128, 128], 48
    batch = 32

    key = jax.random.PRNGKey(0)
    key_x, key_p = jax.random.split(key)
    x = jax.random.normal(key_x, (batch, in_dim), jnp.float32)
    params = init_params(key_p, in_dim, hidden_dims, out_dim)

    out = mlp_head(x, params)
    out = jax.block_until_ready(out)

    ref = mlp_head_ref(x, params)
    assert out.shape == (batch, out_dim)
    max_err = float(jnp.max(jnp.abs(out - ref)))
    assert jnp.allclose(out, ref, atol=2e-3, rtol=2e-2), (
        f"mismatch vs reference (max abs err {max_err})")

    print("KERNEL_OK")
</pallas_src>

<mosaic_0001>
module attributes {stable_mosaic.version = 11 : i64} {
  func.func @mlp_head_kernel(%arg0: i32, %arg1: i32, %arg2: memref<16x64xbf16, #tpu.memory_space<vmem>>, %arg3: memref<64x128xbf16, #tpu.memory_space<vmem>>, %arg4: memref<1x128xf32, #tpu.memory_space<vmem>>, %arg5: memref<128x128xbf16, #tpu.memory_space<vmem>>, %arg6: memref<1x128xf32, #tpu.memory_space<vmem>>, %arg7: memref<128x128xbf16, #tpu.memory_space<vmem>>, %arg8: memref<1x128xf32, #tpu.memory_space<vmem>>, %arg9: memref<16x128xf32, #tpu.memory_space<vmem>>, %arg10: memref<16x128xbf16, #tpu.memory_space<vmem>>) attributes {dimension_semantics = [#tpu.dimension_semantics<parallel>, #tpu.dimension_semantics<arbitrary>], iteration_bounds = array<i64: 2, 1>, scalar_prefetch = 0 : i64, scratch_operands = 1 : i64, tpu.core_type = #tpu.core_type<tc>, window_params = [{transform_indices = @transform_0, window_bounds = array<i64: 16, 64>}, {pipeline_mode = #tpu.pipeline_mode<synchronous>, transform_indices = @transform_1, window_bounds = array<i64: 64, 128>}, {pipeline_mode = #tpu.pipeline_mode<synchronous>, transform_indices = @transform_2, window_bounds = array<i64: 1, 128>}, {pipeline_mode = #tpu.pipeline_mode<synchronous>, transform_indices = @transform_3, window_bounds = array<i64: 128, 128>}, {pipeline_mode = #tpu.pipeline_mode<synchronous>, transform_indices = @transform_4, window_bounds = array<i64: 1, 128>}, {transform_indices = @transform_5, window_bounds = array<i64: 128, 128>}, {transform_indices = @transform_6, window_bounds = array<i64: 1, 128>}, {transform_indices = @transform_7, window_bounds = array<i64: 16, 128>}]} {
    %c0_i32 = arith.constant 0 : i32
    %0 = arith.cmpi eq, %arg1, %c0_i32 : i32
    %1 = arith.extui %0 : i1 to i32
    %c0_i32_0 = arith.constant 0 : i32
    %2 = arith.cmpi ne, %1, %c0_i32_0 : i32
    scf.if %2 {
      %c0_8 = arith.constant 0 : index
      %c0_9 = arith.constant 0 : index
      %10 = vector.load %arg2[%c0_8, %c0_9] : memref<16x64xbf16, #tpu.memory_space<vmem>>, vector<16x64xbf16>
      %c0_10 = arith.constant 0 : index
      %c0_11 = arith.constant 0 : index
      %11 = vector.load %arg3[%c0_10, %c0_11] : memref<64x128xbf16, #tpu.memory_space<vmem>>, vector<64x128xbf16>
      %cst_12 = arith.constant dense<0.000000e+00> : vector<16x128xf32>
      %12 = tpu.matmul %10, %11, %cst_12 {dimension_numbers = #tpu.dot_dimension_numbers<[1], [0], [0], [1], [0, 0, 1, 1], [], []>} : vector<16x64xbf16>, vector<64x128xbf16>, vector<16x128xf32> -> vector<16x128xf32>
      %c0_13 = arith.constant 0 : index
      %c0_14 = arith.constant 0 : index
      %13 = vector.load %arg4[%c0_13, %c0_14] : memref<1x128xf32, #tpu.memory_space<vmem>>, vector<1x128xf32>
      %14 = vector.broadcast %13 : vector<1x128xf32> to vector<16x128xf32>
      %15 = arith.addf %12, %14 : vector<16x128xf32>
      %cst_15 = arith.constant 0.000000e+00 : f32
      %16 = vector.broadcast %cst_15 : f32 to vector<16x128xf32>
      %17 = arith.maximumf %15, %16 : vector<16x128xf32>
      %18 = arith.truncf %17 : vector<16x128xf32> to vector<16x128xbf16>
      %c0_16 = arith.constant 0 : index
      %c0_17 = arith.constant 0 : index
      %19 = vector.load %arg5[%c0_16, %c0_17] : memref<128x128xbf16, #tpu.memory_space<vmem>>, vector<128x128xbf16>
      %cst_18 = arith.constant dense<0.000000e+00> : vector<16x128xf32>
      %20 = tpu.matmul %18, %19, %cst_18 {dimension_numbers = #tpu.dot_dimension_numbers<[1], [0], [0], [1], [0, 0, 1, 1], [], []>} : vector<16x128xbf16>, vector<128x128xbf16>, vector<16x128xf32> -> vector<16x128xf32>
      %c0_19 = arith.constant 0 : index
      %c0_20 = arith.constant 0 : index
      %21 = vector.load %arg6[%c0_19, %c0_20] : memref<1x128xf32, #tpu.memory_space<vmem>>, vector<1x128xf32>
      %22 = vector.broadcast %21 : vector<1x128xf32> to vector<16x128xf32>
      %23 = arith.addf %20, %22 : vector<16x128xf32>
      %cst_21 = arith.constant 0.000000e+00 : f32
      %24 = vector.broadcast %cst_21 : f32 to vector<16x128xf32>
      %25 = arith.maximumf %23, %24 : vector<16x128xf32>
      %26 = arith.truncf %25 : vector<16x128xf32> to vector<16x128xbf16>
      %c0_22 = arith.constant 0 : index
      %c0_23 = arith.constant 0 : index
      %27 = vector.load %arg10[%c0_22, %c0_23] : memref<16x128xbf16, #tpu.memory_space<vmem>>, vector<16x128xbf16>
      tpu.vector_store %arg10[%c0_22, %c0_23], %26 {strides = array<i32>} : memref<16x128xbf16, #tpu.memory_space<vmem>>, vector<16x128xbf16>,
    } else {
    }
    %c0 = arith.constant 0 : index
    %c0_1 = arith.constant 0 : index
    %3 = vector.load %arg10[%c0, %c0_1] : memref<16x128xbf16, #tpu.memory_space<vmem>>, vector<16x128xbf16>
    %c0_2 = arith.constant 0 : index
    %c0_3 = arith.constant 0 : index
    %4 = vector.load %arg7[%c0_2, %c0_3] : memref<128x128xbf16, #tpu.memory_space<vmem>>, vector<128x128xbf16>
    %cst = arith.constant dense<0.000000e+00> : vector<16x128xf32>
    %5 = tpu.matmul %3, %4, %cst {dimension_numbers = #tpu.dot_dimension_numbers<[1], [0], [0], [1], [0, 0, 1, 1], [], []>} : vector<16x128xbf16>, vector<128x128xbf16>, vector<16x128xf32> -> vector<16x128xf32>
    %c0_4 = arith.constant 0 : index
    %c0_5 = arith.constant 0 : index
    %6 = vector.load %arg8[%c0_4, %c0_5] : memref<1x128xf32, #tpu.memory_space<vmem>>, vector<1x128xf32>
    %7 = vector.broadcast %6 : vector<1x128xf32> to vector<16x128xf32>
    %8 = arith.addf %5, %7 : vector<16x128xf32>
    %c0_6 = arith.constant 0 : index
    %c0_7 = arith.constant 0 : index
    %9 = vector.load %arg9[%c0_6, %c0_7] : memref<16x128xf32, #tpu.memory_space<vmem>>, vector<16x128xf32>
    tpu.vector_store %arg9[%c0_6, %c0_7], %8 {strides = array<i32>} : memref<16x128xf32, #tpu.memory_space<vmem>>, vector<16x128xf32>,
    return
  }
  func.func @transform_0(%arg0: i32, %arg1: i32) -> (i32, i32) {
    %c0_i32 = arith.constant 0 : i32
    %c0_i32_0 = arith.constant 0 : i32
    return %arg0, %c0_i32 : i32, i32
  }
  func.func @transform_1(%arg0: i32, %arg1: i32) -> (i32, i32) {
    %c0_i32 = arith.constant 0 : i32
    %c0_i32_0 = arith.constant 0 : i32
    %c0_i32_1 = arith.constant 0 : i32
    return %c0_i32, %c0_i32_0 : i32, i32
  }
  func.func @transform_2(%arg0: i32, %arg1: i32) -> (i32, i32) {
    %c0_i32 = arith.constant 0 : i32
    %c0_i32_0 = arith.constant 0 : i32
    %c0_i32_1 = arith.constant 0 : i32
    return %c0_i32, %c0_i32_0 : i32, i32
  }
  func.func @transform_3(%arg0: i32, %arg1: i32) -> (i32, i32) {
    %c0_i32 = arith.constant 0 : i32
    %c0_i32_0 = arith.constant 0 : i32
    %c0_i32_1 = arith.constant 0 : i32
    return %c0_i32, %c0_i32_0 : i32, i32
  }
  func.func @transform_4(%arg0: i32, %arg1: i32) -> (i32, i32) {
    %c0_i32 = arith.constant 0 : i32
    %c0_i32_0 = arith.constant 0 : i32
    %c0_i32_1 = arith.constant 0 : i32
    return %c0_i32, %c0_i32_0 : i32, i32
  }
  func.func @transform_5(%arg0: i32, %arg1: i32) -> (i32, i32) {
    %c0_i32 = arith.constant 0 : i32
    %c0_i32_0 = arith.constant 0 : i32
    return %c0_i32, %arg1 : i32, i32
  }
  func.func @transform_6(%arg0: i32, %arg1: i32) -> (i32, i32) {
    %c0_i32 = arith.constant 0 : i32
    %c0_i32_0 = arith.constant 0 : i32
    return %c0_i32, %arg1 : i32, i32
  }
  func.func @transform_7(%arg0: i32, %arg1: i32) -> (i32, i32) {
    %c0_i32 = arith.constant 0 : i32
    return %arg0, %arg1 : i32, i32
  }
}

module attributes {stable_mosaic.version = 11 : i64} {
  func.func @mlp_head_kernel(%arg0: i32, %arg1: i32, %arg2: memref<16x64xbf16, #tpu.memory_space<vmem>>, %arg3: memref<64x128xbf16, #tpu.memory_space<vmem>>, %arg4: memref<1x128xf32, #tpu.memory_space<vmem>>, %arg5: memref<128x128xbf16, #tpu.memory_space<vmem>>, %arg6: memref<1x128xf32, #tpu.memory_space<vmem>>, %arg7: memref<128x128xbf16, #tpu.memory_space<vmem>>, %arg8: memref<1x128xf32, #tpu.memory_space<vmem>>, %arg9: memref<16x128xf32, #tpu.memory_space<vmem>>, %arg10: memref<16x128xbf16, #tpu.memory_space<vmem>>) attributes {dimension_semantics = [#tpu.dimension_semantics<parallel>, #tpu.dimension_semantics<arbitrary>], iteration_bounds = array<i64: 2, 1>, scalar_prefetch = 0 : i64, scratch_operands = 1 : i64, tpu.core_type = #tpu.core_type<tc>, window_params = [{transform_indices = @transform_0, window_bounds = array<i64: 16, 64>}, {pipeline_mode = #tpu.pipeline_mode<synchronous>, transform_indices = @transform_1, window_bounds = array<i64: 64, 128>}, {pipeline_mode = #tpu.pipeline_mode<synchronous>, transform_indices = @transform_2, window_bounds = array<i64: 1, 128>}, {pipeline_mode = #tpu.pipeline_mode<synchronous>, transform_indices = @transform_3, window_bounds = array<i64: 128, 128>}, {pipeline_mode = #tpu.pipeline_mode<synchronous>, transform_indices = @transform_4, window_bounds = array<i64: 1, 128>}, {transform_indices = @transform_5, window_bounds = array<i64: 128, 128>}, {transform_indices = @transform_6, window_bounds = array<i64: 1, 128>}, {transform_indices = @transform_7, window_bounds = array<i64: 16, 128>}]} {
    %c0_i32 = arith.constant 0 : i32
    %0 = arith.cmpi eq, %arg1, %c0_i32 : i32
    %1 = arith.extui %0 : i1 to i32
    %c0_i32_0 = arith.constant 0 : i32
    %2 = arith.cmpi ne, %1, %c0_i32_0 : i32
    scf.if %2 {
      %c0_8 = arith.constant 0 : index
      %c0_9 = arith.constant 0 : index
      %10 = vector.load %arg2[%c0_8, %c0_9] : memref<16x64xbf16, #tpu.memory_space<vmem>>, vector<16x64xbf16>
      %c0_10 = arith.constant 0 : index
      %c0_11 = arith.constant 0 : index
      %11 = vector.load %arg3[%c0_10, %c0_11] : memref<64x128xbf16, #tpu.memory_space<vmem>>, vector<64x128xbf16>
      %cst_12 = arith.constant dense<0.000000e+00> : vector<16x128xf32>
      %12 = tpu.matmul %10, %11, %cst_12 {dimension_numbers = #tpu.dot_dimension_numbers<[1], [0], [0], [1], [0, 0, 1, 1], [], []>} : vector<16x64xbf16>, vector<64x128xbf16>, vector<16x128xf32> -> vector<16x128xf32>
      %c0_13 = arith.constant 0 : index
      %c0_14 = arith.constant 0 : index
      %13 = vector.load %arg4[%c0_13, %c0_14] : memref<1x128xf32, #tpu.memory_space<vmem>>, vector<1x128xf32>
      %14 = vector.broadcast %13 : vector<1x128xf32> to vector<16x128xf32>
      %15 = arith.addf %12, %14 : vector<16x128xf32>
      %cst_15 = arith.constant 0.000000e+00 : f32
      %16 = vector.broadcast %cst_15 : f32 to vector<16x128xf32>
      %17 = arith.maximumf %15, %16 : vector<16x128xf32>
      %18 = arith.truncf %17 : vector<16x128xf32> to vector<16x128xbf16>
      %c0_16 = arith.constant 0 : index
      %c0_17 = arith.constant 0 : index
      %19 = vector.load %arg5[%c0_16, %c0_17] : memref<128x128xbf16, #tpu.memory_space<vmem>>, vector<128x128xbf16>
      %cst_18 = arith.constant dense<0.000000e+00> : vector<16x128xf32>
      %20 = tpu.matmul %18, %19, %cst_18 {dimension_numbers = #tpu.dot_dimension_numbers<[1], [0], [0], [1], [0, 0, 1, 1], [], []>} : vector<16x128xbf16>, vector<128x128xbf16>, vector<16x128xf32> -> vector<16x128xf32>
      %c0_19 = arith.constant 0 : index
      %c0_20 = arith.constant 0 : index
      %21 = vector.load %arg6[%c0_19, %c0_20] : memref<1x128xf32, #tpu.memory_space<vmem>>, vector<1x128xf32>
      %22 = vector.broadcast %21 : vector<1x128xf32> to vector<16x128xf32>
      %23 = arith.addf %20, %22 : vector<16x128xf32>
      %cst_21 = arith.constant 0.000000e+00 : f32
      %24 = vector.broadcast %cst_21 : f32 to vector<16x128xf32>
      %25 = arith.maximumf %23, %24 : vector<16x128xf32>
      %26 = arith.truncf %25 : vector<16x128xf32> to vector<16x128xbf16>
      %c0_22 = arith.constant 0 : index
      %c0_23 = arith.constant 0 : index
      %27 = vector.load %arg10[%c0_22, %c0_23] : memref<16x128xbf16, #tpu.memory_space<vmem>>, vector<16x128xbf16>
      tpu.vector_store %arg10[%c0_22, %c0_23], %26 {strides = array<i32>} : memref<16x128xbf16, #tpu.memory_space<vmem>>, vector<16x128xbf16>,
    } else {
    }
    %c0 = arith.constant 0 : index
    %c0_1 = arith.constant 0 : index
    %3 = vector.load %arg10[%c0, %c0_1] : memref<16x128xbf16, #tpu.memory_space<vmem>>, vector<16x128xbf16>
    %c0_2 = arith.constant 0 : index
    %c0_3 = arith.constant 0 : index
    %4 = vector.load %arg7[%c0_2, %c0_3] : memref<128x128xbf16, #tpu.memory_space<vmem>>, vector<128x128xbf16>
    %cst = arith.constant dense<0.000000e+00> : vector<16x128xf32>
    %5 = tpu.matmul %3, %4, %cst {dimension_numbers = #tpu.dot_dimension_numbers<[1], [0], [0], [1], [0, 0, 1, 1], [], []>} : vector<16x128xbf16>, vector<128x128xbf16>, vector<16x128xf32> -> vector<16x128xf32>
    %c0_4 = arith.constant 0 : index
    %c0_5 = arith.constant 0 : index
    %6 = vector.load %arg8[%c0_4, %c0_5] : memref<1x128xf32, #tpu.memory_space<vmem>>, vector<1x128xf32>
    %7 = vector.broadcast %6 : vector<1x128xf32> to vector<16x128xf32>
    %8 = arith.addf %5, %7 : vector<16x128xf32>
    %c0_6 = arith.constant 0 : index
    %c0_7 = arith.constant 0 : index
    %9 = vector.load %arg9[%c0_6, %c0_7] : memref<16x128xf32, #tpu.memory_space<vmem>>, vector<16x128xf32>
    tpu.vector_store %arg9[%c0_6, %c0_7], %8 {strides = array<i32>} : memref<16x128xf32, #tpu.memory_space<vmem>>, vector<16x128xf32>,
    return
  }
  func.func @transform_0(%arg0: i32, %arg1: i32) -> (i32, i32) {
    %c0_i32 = arith.constant 0 : i32
    %c0_i32_0 = arith.constant 0 : i32
    return %arg0, %c0_i32 : i32, i32
  }
  func.func @transform_1(%arg0: i32, %arg1: i32) -> (i32, i32) {
    %c0_i32 = arith.constant 0 : i32
    %c0_i32_0 = arith.constant 0 : i32
    %c0_i32_1 = arith.constant 0 : i32
    return %c0_i32, %c0_i32_0 : i32, i32
  }
  func.func @transform_2(%arg0: i32, %arg1: i32) -> (i32, i32) {
    %c0_i32 = arith.constant 0 : i32
    %c0_i32_0 = arith.constant 0 : i32
    %c0_i32_1 = arith.constant 0 : i32
    return %c0_i32, %c0_i32_0 : i32, i32
  }
  func.func @transform_3(%arg0: i32, %arg1: i32) -> (i32, i32) {
    %c0_i32 = arith.constant 0 : i32
    %c0_i32_0 = arith.constant 0 : i32
    %c0_i32_1 = arith.constant 0 : i32
    return %c0_i32, %c0_i32_0 : i32, i32
  }
  func.func @transform_4(%arg0: i32, %arg1: i32) -> (i32, i32) {
    %c0_i32 = arith.constant 0 : i32
    %c0_i32_0 = arith.constant 0 : i32
    %c0_i32_1 = arith.constant 0 : i32
    return %c0_i32, %c0_i32_0 : i32, i32
  }
  func.func @transform_5(%arg0: i32, %arg1: i32) -> (i32, i32) {
    %c0_i32 = arith.constant 0 : i32
    %c0_i32_0 = arith.constant 0 : i32
    return %c0_i32, %arg1 : i32, i32
  }
  func.func @transform_6(%arg0: i32, %arg1: i32) -> (i32, i32) {
    %c0_i32 = arith.constant 0 : i32
    %c0_i32_0 = arith.constant 0 : i32
    return %c0_i32, %arg1 : i32, i32
  }
  func.func @transform_7(%arg0: i32, %arg1: i32) -> (i32, i32) {
    %c0_i32 = arith.constant 0 : i32
    return %arg0, %arg1 : i32, i32
  }
}

</mosaic_0001>

<llo_original>
// kernel: tpu_custom_call.1
$region0: #{tpu_custom_call.1}
  #allocation0 [shape = 'u32[]', space=smem, size = 0x4, offset = 0x4, fixed_abs, tag = 'smem constant byte address 0x4 - core index']
  #allocation1 [shape = 'u32[144,128]{1,0:T(1,128)}', space=vmem, size = 0x12000, scoped, tag = 'internal scratch']
  #allocation2 [shape = 'bf16[16,128]{1,0:T(8,128)(2,1)}', space=vmem, size = 0x1000, scoped, tag = 'scratch operand']
  %s0 = inlined_call_operand.hbm [shape: bf16[32,64], index: 0, kind: input, shape index: {}]
  %s1 = inlined_call_operand.hbm [shape: bf16[64,128], index: 1, kind: input, shape index: {}]
  %s2 = inlined_call_operand.vmem [shape: f32[1,128], index: 2, kind: input, shape index: {}]
  %s3 = inlined_call_operand.hbm [shape: bf16[128,128], index: 3, kind: input, shape index: {}]
  %s4 = inlined_call_operand.vmem [shape: f32[1,128], index: 4, kind: input, shape index: {}]
  %s5 = inlined_call_operand.hbm [shape: bf16[128,128], index: 5, kind: input, shape index: {}]
  %s6 = inlined_call_operand.vmem [shape: f32[1,128], index: 6, kind: input, shape index: {}]
  %s7 = inlined_call_operand.hbm [shape: f32[32,128], index: 7, kind: output, shape index: {}]
  %s8 = sld [smem:[#allocation0]]
  $region81: #{tpu_custom_call.1} parent=0
    _
  %s10 = ssub.s32 1, %s8
  %s11 = scalar_select 0, %s10, %s8
  $region1: #{tpu_custom_call.1} parent=0
    #allocation3 [shape = 'u8[8192]{0}', space=vmem, size = 0x2000, scoped, tag = 'input window, operand 0']
    #allocation4 [shape = 's32[2]{0}', space=sflag, size = 0x8, scoped, tag = 'scoped memory for tpu_custom_call.1']
    #allocation5 [shape = 's32[2]{0}', space=sflag, size = 0x8, scoped, tag = 'scoped memory for tpu_custom_call.1']
    #allocation6 [shape = 'u8[16384]{0}', space=vmem, size = 0x4000, scoped, tag = 'input window, operand 1, single buffered']
    #allocation7 [shape = 's32[1]{0}', space=sflag, size = 0x4, scoped, tag = 'scoped memory for tpu_custom_call.1']
    #allocation8 [shape = 'u8[32768]{0}', space=vmem, size = 0x8000, scoped, tag = 'input window, operand 3, single buffered']
    #allocation9 [shape = 'u8[32768]{0}', space=vmem, size = 0x8000, scoped, tag = 'input window, operand 5, single buffered']
    #allocation10 [shape = 's32[1]{0}', space=sflag, size = 0x4, scoped, tag = 'scoped memory for tpu_custom_call.1']
    #allocation11 [shape = 'u8[16384]{0}', space=vmem, size = 0x4000, scoped, tag = 'output window, operand 0']
    %12 = vsyncpa [#allocation4], 0
    %s13 = scalar_lea.sflag [#allocation4], 1
    %14 = vsyncpa %s13, 0
    %15 = vsyncpa [#allocation7], 0
    %16 = vsyncpa [#allocation10], 0
    %17 = vsyncpa [#allocation5], 0
    %s18 = scalar_lea.sflag [#allocation5], 1
    %19 = vsyncpa %s18, 0
    loop: start=0, step=1, limit=4
    $region2: #{tpu_custom_call.1} parent=1 // loop_pre_header
      _
    $region3: #{tpu_custom_call.1} parent=1 // loop_header
      %s21 = sphi 0, %s25
      %p22 = scmp.ge.s32.totalorder %s21, 4
      %s28 = sphi 0, %s40
      %s29 = sphi 0, %s36
      %s30 = sphi 0, %s28
      %s31 = sphi 0, %s29
      %s32 = sphi 0, %s30
      %s33 = sphi 0, %s31
      %s43 = sphi 0, %s45
      %s46 = sphi 0, %s43
      %s47 = sphi 0, %s46
      %s63 = sphi 0, %s47
      %s67 = sphi 0, %s67
      %s69 = sphi 0, %s67
      %s70 = sphi 0, %s69
      %s84 = sphi 0, %s70
      %s88 = sphi 0, %s88
      %s90 = sphi 0, %s88
      %s91 = sphi 0, %s90
      %s105 = sphi 0, %s91
      %s109 = sphi 0, %s109
      %s111 = sphi 0, %s109
      %s112 = sphi 0, %s111
      %s126 = sphi 0, %s112
      %s130 = sphi 0, %s130
      %s132 = sphi 0, %s130
      %s133 = sphi 0, %s132
      %s147 = sphi 0, %s133
      %s153 = sphi 0, %s155
      %s156 = sphi 0, %s153
      %s157 = sphi 0, %s156
      %s173 = sphi 0, %s157
      %s179 = sphi 0, %s181
      %s182 = sphi 0, %s179
      %s183 = sphi 0, %s182
      %s199 = sphi 0, %s183
      %s207 = sphi 0, %s209
      %s210 = sphi 0, %s207
      %s211 = sphi 0, %s210
      %s227 = sphi 0, %s211
    $region4: #{tpu_custom_call.1} parent=1 // loop_header_branch
      %24 = sbr.rel (%p22) target = $region8
    $region5: #{tpu_custom_call.1} parent=1 // loop_body
      %s26 = ssub.s32 %s21, 1
      %s27 = ssub.s32 %s21, 2
      %s34 = sadd.s32 1, %s29
      %p35 = scmp.ge.s32.totalorder %s34, 1
      %s36 = scalar_select %p35, 0, %s34
      %s37 = sadd.s32 1, %s28
      %s38 = scalar_select %p35, %s37, %s28
      %p39 = scmp.ge.s32.totalorder %s38, 2
      %s40 = scalar_select %p39, 0, %s38
      %s41 = ssub.s32 %s28, %s40
      %p42 = scmp.eq.s32.totalorder %s41, 0
      %s44 = sadd.s32 %s43, 1
      %s45 = scalar_select %p42, %s43, %s44
      %p48 = pneg %p42
      %p49 = scmp.eq.s32.totalorder %s21, 1
      %p50 = por %p48, %p49
      %p51 = scmp.ne.s32.totalorder %s43, %s46
      %p52 = scmp.eq.s32.totalorder %s21, 0
      %p53 = por %p51, %p52
      %p54 = scmp.ne.s32.totalorder %s43, %s46
      %p55 = scmp.eq.s32.totalorder %s26, 1
      %p56 = por %p54, %p55
      %p57 = scmp.ne.s32.totalorder %s46, %s47
      %p58 = scmp.eq.s32.totalorder %s26, 0
      %p59 = por %p57, %p58
      %p60 = scmp.ne.s32.totalorder %s46, %s47
      %p61 = scmp.eq.s32.totalorder %s27, 1
      %p62 = por %p60, %p61
      %p64 = scmp.ne.s32.totalorder %s47, %s63
      %p65 = scmp.eq.s32.totalorder %s27, 0
      %p66 = por %p64, %p65
      %s68 = sadd.s32 %s67, 1
      %p71 = scmp.eq.s32.totalorder %s21, 1
      %p72 = scmp.ne.s32.totalorder %s67, %s69
      %p73 = scmp.eq.s32.totalorder %s21, 0
      %p74 = por %p72, %p73
      %p75 = scmp.ne.s32.totalorder %s67, %s69
      %p76 = scmp.eq.s32.totalorder %s26, 1
      %p77 = por %p75, %p76
      %p78 = scmp.ne.s32.totalorder %s69, %s70
      %p79 = scmp.eq.s32.totalorder %s26, 0
      %p80 = por %p78, %p79
      %p81 = scmp.ne.s32.totalorder %s69, %s70
      %p82 = scmp.eq.s32.totalorder %s27, 1
      %p83 = por %p81, %p82
      %p85 = scmp.ne.s32.totalorder %s70, %s84
      %p86 = scmp.eq.s32.totalorder %s27, 0
      %p87 = por %p85, %p86
      %s89 = sadd.s32 %s88, 1
      %p92 = scmp.eq.s32.totalorder %s21, 1
      %p93 = scmp.ne.s32.totalorder %s88, %s90
      %p94 = scmp.eq.s32.totalorder %s21, 0
      %p95 = por %p93, %p94
      %p96 = scmp.ne.s32.totalorder %s88, %s90
      %p97 = scmp.eq.s32.totalorder %s26, 1
      %p98 = por %p96, %p97
      %p99 = scmp.ne.s32.totalorder %s90, %s91
      %p100 = scmp.eq.s32.totalorder %s26, 0
      %p101 = por %p99, %p100
      %p102 = scmp.ne.s32.totalorder %s90, %s91
      %p103 = scmp.eq.s32.totalorder %s27, 1
      %p104 = por %p102, %p103
      %p106 = scmp.ne.s32.totalorder %s91, %s105
      %p107 = scmp.eq.s32.totalorder %s27, 0
      %p108 = por %p106, %p107
      %s110 = sadd.s32 %s109, 1
      %p113 = scmp.eq.s32.totalorder %s21, 1
      %p114 = scmp.ne.s32.totalorder %s109, %s111
      %p115 = scmp.eq.s32.totalorder %s21, 0
      %p116 = por %p114, %p115
      %p117 = scmp.ne.s32.totalorder %s109, %s111
      %p118 = scmp.eq.s32.totalorder %s26, 1
      %p119 = por %p117, %p118
      %p120 = scmp.ne.s32.totalorder %s111, %s112
      %p121 = scmp.eq.s32.totalorder %s26, 0
      %p122 = por %p120, %p121
      %p123 = scmp.ne.s32.totalorder %s111, %s112
      %p124 = scmp.eq.s32.totalorder %s27, 1
      %p125 = por %p123, %p124
      %p127 = scmp.ne.s32.totalorder %s112, %s126
      %p128 = scmp.eq.s32.totalorder %s27, 0
      %p129 = por %p127, %p128
      %s131 = sadd.s32 %s130, 1
      %p134 = scmp.eq.s32.totalorder %s21, 1
      %p135 = scmp.ne.s32.totalorder %s130, %s132
      %p136 = scmp.eq.s32.totalorder %s21, 0
      %p137 = por %p135, %p136
      %p138 = scmp.ne.s32.totalorder %s130, %s132
      %p139 = scmp.eq.s32.totalorder %s26, 1
      %p140 = por %p138, %p139
      %p141 = scmp.ne.s32.totalorder %s132, %s133
      %p142 = scmp.eq.s32.totalorder %s26, 0
      %p143 = por %p141, %p142
      %p144 = scmp.ne.s32.totalorder %s132, %s133
      %p145 = scmp.eq.s32.totalorder %s27, 1
      %p146 = por %p144, %p145
      %p148 = scmp.ne.s32.totalorder %s133, %s147
      %p149 = scmp.eq.s32.totalorder %s27, 0
      %p150 = por %p148, %p149
      %s151 = ssub.s32 %s29, %s36
      %p152 = scmp.eq.s32.totalorder %s151, 0
      %s154 = sadd.s32 %s153, 1
      %s155 = scalar_select %p152, %s153, %s154
      %p158 = pneg %p152
      %p159 = scmp.eq.s32.totalorder %s21, 1
      %p160 = por %p158, %p159
      %p161 = scmp.ne.s32.totalorder %s153, %s156
      %p162 = scmp.eq.s32.totalorder %s21, 0
      %p163 = por %p161, %p162
      %p164 = scmp.ne.s32.totalorder %s153, %s156
      %p165 = scmp.eq.s32.totalorder %s26, 1
      %p166 = por %p164, %p165
      %p167 = scmp.ne.s32.totalorder %s156, %s157
      %p168 = scmp.eq.s32.totalorder %s26, 0
      %p169 = por %p167, %p168
      %p170 = scmp.ne.s32.totalorder %s156, %s157
      %p171 = scmp.eq.s32.totalorder %s27, 1
      %p172 = por %p170, %p171
      %p174 = scmp.ne.s32.totalorder %s157, %s173
      %p175 = scmp.eq.s32.totalorder %s27, 0
      %p176 = por %p174, %p175
      %s177 = ssub.s32 %s29, %s36
      %p178 = scmp.eq.s32.totalorder %s177, 0
      %s180 = sadd.s32 %s179, 1
      %s181 = scalar_select %p178, %s179, %s180
      %p184 = pneg %p178
      %p185 = scmp.eq.s32.totalorder %s21, 1
      %p186 = por %p184, %p185
      %p187 = scmp.ne.s32.totalorder %s179, %s182
      %p188 = scmp.eq.s32.totalorder %s21, 0
      %p189 = por %p187, %p188
      %p190 = scmp.ne.s32.totalorder %s179, %s182
      %p191 = scmp.eq.s32.totalorder %s26, 1
      %p192 = por %p190, %p191
      %p193 = scmp.ne.s32.totalorder %s182, %s183
      %p194 = scmp.eq.s32.totalorder %s26, 0
      %p195 = por %p193, %p194
      %p196 = scmp.ne.s32.totalorder %s182, %s183
      %p197 = scmp.eq.s32.totalorder %s27, 1
      %p198 = por %p196, %p197
      %p200 = scmp.ne.s32.totalorder %s183, %s199
      %p201 = scmp.eq.s32.totalorder %s27, 0
      %p202 = por %p200, %p201
      %s203 = ssub.s32 %s28, %s40
      %s204 = ssub.s32 %s29, %s36
      %s205 = sor.u32 %s203, %s204
      %p206 = scmp.eq.s32.totalorder %s205, 0
      %s208 = sadd.s32 %s207, 1
      %s209 = scalar_select %p206, %s207, %s208
      %p212 = pneg %p206
      %p213 = scmp.eq.s32.totalorder %s21, 1
      %p214 = por %p212, %p213
      %p215 = scmp.ne.s32.totalorder %s207, %s210
      %p216 = scmp.eq.s32.totalorder %s21, 0
      %p217 = por %p215, %p216
      %p218 = scmp.ne.s32.totalorder %s207, %s210
      %p219 = scmp.eq.s32.totalorder %s26, 1
      %p220 = por %p218, %p219
      %p221 = scmp.ne.s32.totalorder %s210, %s211
      %p222 = scmp.eq.s32.totalorder %s26, 0
      %p223 = por %p221, %p222
      %p224 = scmp.ne.s32.totalorder %s210, %s211
      %p225 = scmp.eq.s32.totalorder %s27, 1
      %p226 = por %p224, %p225
      %p228 = scmp.ne.s32.totalorder %s211, %s227
      %p229 = scmp.eq.s32.totalorder %s27, 0
      %p230 = por %p228, %p229
      %p231 = scmp.le.s32.totalorder 1, %s21
      %p232 = scmp.lt.s32.totalorder %s21, 3
      %p233 = pnand %p231, %p232
      %p234 = pneg %p233
      // Predicated region
      $region9: #{tpu_custom_call.1} parent=5 // pred_check
        _
      $region10: #{tpu_custom_call.1} parent=5 // pred_check_branch
        %236 = sbr.rel (%p233) target = $region12
      $region11: #{tpu_custom_call.1} parent=5 // pred_region
        %s237 = ssub.s32 %s21, 1
        // Predicated region
        $region13: #{tpu_custom_call.1} parent=11 // pred_check
          %p238 = pneg %p80
        $region14: #{tpu_custom_call.1} parent=11 // pred_check_branch
          %240 = sbr.rel (%p238) target = $region16
        $region15: #{tpu_custom_call.1} parent=11 // pred_region
          %s242 = ssub.s32 512, 512
          %243 = vsyncadd [#allocation7], %s242
          %s244 = sshll.u32 [#allocation6], 4
          %s245 = int_to_ptr.vmem [resolvable:$true] %s244
          %250 = dma.hbm_to_vmem [thread:$0]  %s1, 512, %s245, [#allocation7], 64, 64, 4
        $region16: #{tpu_custom_call.1} parent=11 // pred_fallthru
          _
        // Predicated region
        $region17: #{tpu_custom_call.1} parent=11 // pred_check
          %p251 = pneg %p101
        $region18: #{tpu_custom_call.1} parent=11 // pred_check_branch
          %253 = sbr.rel (%p251) target = $region20
        $region19: #{tpu_custom_call.1} parent=11 // pred_region
          _
        $region20: #{tpu_custom_call.1} parent=11 // pred_fallthru
          _
        // Predicated region
        $region21: #{tpu_custom_call.1} parent=11 // pred_check
          %p254 = pneg %p122
        $region22: #{tpu_custom_call.1} parent=11 // pred_check_branch
          %256 = sbr.rel (%p254) target = $region24
        $region23: #{tpu_custom_call.1} parent=11 // pred_region
          %s258 = ssub.s32 1024, 1024
          %259 = vsyncadd [#allocation7], %s258
          %s260 = sshll.u32 [#allocation8], 4
          %s261 = int_to_ptr.vmem [resolvable:$true] %s260
          %266 = dma.hbm_to_vmem [thread:$0]  %s3, 1024, %s261, [#allocation7], 64, 64, 4
        $region24: #{tpu_custom_call.1} parent=11 // pred_fallthru
          _
        // Predicated region
        $region25: #{tpu_custom_call.1} parent=11 // pred_check
          %p267 = pneg %p143
        $region26: #{tpu_custom_call.1} parent=11 // pred_check_branch
          %269 = sbr.rel (%p267) target = $region28
        $region27: #{tpu_custom_call.1} parent=11 // pred_region
          _
        $region28: #{tpu_custom_call.1} parent=11 // pred_fallthru
          _
        // Predicated region
        $region29: #{tpu_custom_call.1} parent=11 // pred_check
          %p270 = pneg %p169
        $region30: #{tpu_custom_call.1} parent=11 // pred_check_branch
          %272 = sbr.rel (%p270) target = $region32
        $region31: #{tpu_custom_call.1} parent=11 // pred_region
          %s274 = ssub.s32 1024, 1024
          %275 = vsyncadd [#allocation10], %s274
          %s276 = smul.addr %s31, 64
          %s277 = scalar_lea.hbm %s5, %s276
          %s278 = sshll.u32 [#allocation9], 4
          %s279 = int_to_ptr.vmem [resolvable:$true] %s278
          %284 = dma.hbm_to_vmem [thread:$0]  %s277, 1024, %s279, [#allocation10], 64, 64, 4
        $region32: #{tpu_custom_call.1} parent=11 // pred_fallthru
          _
        // Predicated region
        $region33: #{tpu_custom_call.1} parent=11 // pred_check
          %p285 = pneg %p195
        $region34: #{tpu_custom_call.1} parent=11 // pred_check_branch
          %287 = sbr.rel (%p285) target = $region36
        $region35: #{tpu_custom_call.1} parent=11 // pred_region
          %p288 = scmp.lt.s32.totalorder %s31, 0
          %s289 = scalar_select %p288, %s31, 0
          %s290 = scalar_lea.vmem %s6, %s289
        $region36: #{tpu_custom_call.1} parent=11 // pred_fallthru
          _
      $region12: #{tpu_custom_call.1} parent=5 // pred_fallthru
        _
      %p291 = scmp.lt.s32.totalorder %s21, 2
      // Predicated region
      $region37: #{tpu_custom_call.1} parent=5 // pred_check
        %p292 = pneg %p291
      $region38: #{tpu_custom_call.1} parent=5 // pred_check_branch
        %294 = sbr.rel (%p292) target = $region40
      $region39: #{tpu_custom_call.1} parent=5 // pred_region
        // Predicated region
        $region41: #{tpu_custom_call.1} parent=39 // pred_check
          %p295 = pneg %p53
        $region42: #{tpu_custom_call.1} parent=39 // pred_check_branch
          %297 = sbr.rel (%p295) target = $region44
        $region43: #{tpu_custom_call.1} parent=39 // pred_region
          %s298 = sand.u32 %s43, 1
          %s299 = scalar_lea.sflag [#allocation4], %s298
          %s300 = sand.u32 %s43, 1
          %s301 = smul.addr %s300, 8
          %s302 = scalar_lea.vmem [#allocation3], %s301
          %s303 = smul.u32 2, %s28
          %s305 = ssub.s32 128, 128
          %306 = vsyncadd %s299, %s305
          %s307 = smul.addr %s303, 64
          %s308 = scalar_lea.hbm %s0, %s307
          %s309 = sshll.u32 %s302, 4
          %s310 = int_to_ptr.vmem [resolvable:$true] %s309
          %315 = dma.hbm_to_vmem [thread:$0]  %s308, 128, %s310, %s299, 64, 64, 4
        $region44: #{tpu_custom_call.1} parent=39 // pred_fallthru
          _
      $region40: #{tpu_custom_call.1} parent=5 // pred_fallthru
        _
      %p316 = scmp.le.s32.totalorder 1, %s21
      %p317 = scmp.lt.s32.totalorder %s21, 3
      %p318 = pnand %p316, %p317
      %p319 = pneg %p318
      // Predicated region
      $region45: #{tpu_custom_call.1} parent=5 // pred_check
        _
      $region46: #{tpu_custom_call.1} parent=5 // pred_check_branch
        %321 = sbr.rel (%p318) target = $region48
      $region47: #{tpu_custom_call.1} parent=5 // pred_region
        %s322 = ssub.s32 %s21, 1
        %s323 = sand.u32 %s46, 1
        %s324 = scalar_lea.sflag [#allocation4], %s323
        %s325 = sand.u32 %s46, 1
        %s326 = smul.addr %s325, 8
        %s327 = scalar_lea.vmem [#allocation3], %s326
        // Predicated region
        $region49: #{tpu_custom_call.1} parent=47 // pred_check
          %p328 = pneg %p59
        $region50: #{tpu_custom_call.1} parent=47 // pred_check_branch
          %330 = sbr.rel (%p328) target = $region52
        $region51: #{tpu_custom_call.1} parent=47 // pred_region
          %331 = dma.done %s324, 128
        $region52: #{tpu_custom_call.1} parent=47 // pred_fallthru
          _
        // Predicated region
        $region53: #{tpu_custom_call.1} parent=47 // pred_check
          %p332 = pneg %p80
        $region54: #{tpu_custom_call.1} parent=47 // pred_check_branch
          %334 = sbr.rel (%p332) target = $region56
        $region55: #{tpu_custom_call.1} parent=47 // pred_region
          %335 = dma.done [#allocation7], 512
        $region56: #{tpu_custom_call.1} parent=47 // pred_fallthru
          _
        // Predicated region
        $region57: #{tpu_custom_call.1} parent=47 // pred_check
          %p336 = pneg %p122
        $region58: #{tpu_custom_call.1} parent=47 // pred_check_branch
          %338 = sbr.rel (%p336) target = $region60
        $region59: #{tpu_custom_call.1} parent=47 // pred_region
          %339 = dma.done [#allocation7], 1024
        $region60: #{tpu_custom_call.1} parent=47 // pred_fallthru
          _
        // Predicated region
        $region61: #{tpu_custom_call.1} parent=47 // pred_check
          %p340 = pneg %p169
        $region62: #{tpu_custom_call.1} parent=47 // pred_check_branch
          %342 = sbr.rel (%p340) target = $region64
        $region63: #{tpu_custom_call.1} parent=47 // pred_region
          %343 = dma.done [#allocation10], 1024
        $region64: #{tpu_custom_call.1} parent=47 // pred_fallthru
          _
        %s344 = sand.u32 %s46, 1
        %s345 = scalar_lea.sflag [#allocation4], %s344
        %s346 = sand.u32 %s46, 1
        %s347 = smul.addr %s346, 8
        %s348 = scalar_lea.vmem [#allocation3], %s347
        %p349 = pneg %p59
        %p350 = pneg %p56
        %p351 = pneg %p80
        %p352 = pneg %p77
        %p353 = pneg %p101
        %p354 = pneg %p98
        %p355 = pneg %p122
        %p356 = pneg %p119
        %p357 = pneg %p143
        %p358 = pneg %p140
        %p359 = pneg %p169
        %p360 = pneg %p166
        %p361 = scmp.lt.s32.totalorder %s31, 0
        %s362 = scalar_select %p361, %s31, 0
        %s363 = scalar_lea.vmem %s6, %s362
        %p364 = pneg %p195
        %p365 = pneg %p192
        %p366 = pneg %p223
        %p367 = pneg %p220
        %s368 = sand.u32 %s210, 1
        %s369 = scalar_lea.sflag [#allocation5], %s368
        %s370 = sand.u32 %s210, 1
        %s371 = smul.addr %s370, 16
        %s372 = scalar_lea.vmem [#allocation11], %s371
        %s373 = smul.u32 2, %s30
        %p374 = scmp.lt.s32.totalorder %s31, 0
        %s375 = scalar_select %p374, %s31, 0
        %s376 = scalar_lea.vmem %s6, %s375
        %s377 = smul.u32 2, %s30
        %p379 = scmp.eq.s32.totalorder %s31, 0
        // Predicated region
        $region65: #{tpu_custom_call.1} parent=47 // pred_check
          %p380 = pneg %p379
        $region66: #{tpu_custom_call.1} parent=47 // pred_check_branch
          %382 = sbr.rel (%p380) target = $region68
        $region67: #{tpu_custom_call.1} parent=47 // pred_region
          %v383 = vld [vmem:[%s327] sm:$0xf]
          %v384 = vld [vmem:[%s327 + $0x4] sm:$0xf]
          %v385 = vld [vmem:[#allocation6] sm:$0xf]
          %v386 = vld [vmem:[#allocation6 + $0x4] sm:$0xf]
          %v387 = vld [vmem:[#allocation6 + $0x8] sm:$0xf]
          %v388 = vld [vmem:[#allocation6 + $0xc] sm:$0xf]
          %v389 = vld [vmem:[#allocation6 + $0x10] sm:$0xf]
          %v390 = vld [vmem:[#allocation6 + $0x14] sm:$0xf]
          %v391 = vld [vmem:[#allocation6 + $0x18] sm:$0xf]
          %v392 = vld [vmem:[#allocation6 + $0x1c] sm:$0xf]
          %v393 = vld [vmem:[%s2] sm:$0x1]
          %v395 = vlaneseq
          %v396 = vshrl.u32 %v395, 7
          %v397 = vsub.s32 0, %v396
          %v398 = vrot.slane %v393, %v397
          %v402 = vunpack.c.l.b16 %v383
          %v403 = vunpack.c.l.b16 %v384
          %v404 = vpack.c.b16 %v403, %v402
          %v413 = vunpack.c.l.b16 %v385
          %v414 = vunpack.c.l.b16 %v386
          %v415 = vunpack.c.l.b16 %v387
          %v416 = vunpack.c.l.b16 %v388
          %v417 = vunpack.c.l.b16 %v389
          %v418 = vunpack.c.l.b16 %v390
          %v419 = vunpack.c.l.b16 %v391
          %v420 = vunpack.c.l.b16 %v392
          %v421 = vpack.c.b16 %v414, %v413
          %v422 = vpack.c.b16 %v416, %v415
          %v423 = vpack.c.b16 %v418, %v417
          %v424 = vpack.c.b16 %v420, %v419
          %vm429 = vcmask 523264
          %v431 = vsel %vm429, %v404, 0
          %433 = vmatprep.subr.bf16.mxu0 0
          %434 = vmatpush1.bf16.msra.mxu0 0
          %435 = vmatprep.subr.bf16.mxu0 0
          %436 = vmatpush1.bf16.msra.mxu0 0
          %437 = vmatprep.subr.bf16.mxu0 0
          %438 = vmatpush1.bf16.msra.mxu0 0
          %439 = vmatprep.subr.bf16.mxu0 0
          %440 = vmatpush1.bf16.msra.mxu0 0
          %441 = vmatprep.subr.bf16.mxu0 0
          %442 = vmatpush1.bf16.msra.mxu0 %v424
          %443 = vmatprep.subr.bf16.mxu0 0
          %444 = vmatpush1.bf16.msra.mxu0 %v423
          %445 = vmatprep.subr.bf16.mxu0 0
          %446 = vmatpush1.bf16.msra.mxu0 %v422
          %447 = vmatprep.subr.bf16.mxu0 0
          %448 = vmatpush1.bf16.msra.mxu0 %v421
          %449 = vmatprep.subr.bf16.mxu0 0
          %450 = vmatpush2.bf16.msra.mxu0 0
          %451 = vmatprep.subr.bf16.mxu0 0
          %452 = vmatpush2.bf16.msra.mxu0 0
          %453 = vmatprep.subr.bf16.mxu0 0
          %454 = vmatpush2.bf16.msra.mxu0 0
          %455 = vmatprep.subr.bf16.mxu0 0
          %456 = vmatpush2.bf16.msra.mxu0 0
          %457 = vmatprep.subr.bf16.mxu0 0
          %458 = vmatpush2.bf16.msra.mxu0 0
          %459 = vmatprep.subr.bf16.mxu0 0
          %460 = vmatpush2.bf16.msra.mxu0 0
          %461 = vmatprep.subr.bf16.mxu0 0
          %462 = vmatpush2.bf16.msra.mxu0 0
          %463 = vmatprep.subr.bf16.mxu0 0
          %464 = vmatpush2.bf16.msra.mxu0 0
          %465 = vmatprep.mubr.bf16.mxu0 0
          %466 = vmatmul.mubr.bf16.gmra.mxu0 %v431
          %v467 = vpop.f32.mrf.mxu0
          %v468 = vadd.f32 %v398, %v467
          %v469 = vpop.f32.mrf.mxu0
          %v470 = vpop.f32.mrf.mxu0
          %v471 = vadd.f32 %v398, %v470
          %v472 = vpop.f32.mrf.mxu0
          %473 = vdwg.mxu0
          %v474 = vmax.f32 %v468, 0.0
          %v475 = vmax.f32 %v471, 0.0
          %v476 = vpack.c.bf16 %v475, %v474
          %v477 = vld [vmem:[#allocation8] sm:$0xf]
          %v478 = vld [vmem:[#allocation8 + $0x4] sm:$0xf]
          %v479 = vld [vmem:[#allocation8 + $0x8] sm:$0xf]
          %v480 = vld [vmem:[#allocation8 + $0xc] sm:$0xf]
          %v481 = vld [vmem:[#allocation8 + $0x10] sm:$0xf]
          %v482 = vld [vmem:[#allocation8 + $0x14] sm:$0xf]
          %v483 = vld [vmem:[#allocation8 + $0x18] sm:$0xf]
          %v484 = vld [vmem:[#allocation8 + $0x1c] sm:$0xf]
          %v485 = vld [vmem:[#allocation8 + $0x20] sm:$0xf]
          %v486 = vld [vmem:[#allocation8 + $0x24] sm:$0xf]
          %v487 = vld [vmem:[#allocation8 + $0x28] sm:$0xf]
          %v488 = vld [vmem:[#allocation8 + $0x2c] sm:$0xf]
          %v489 = vld [vmem:[#allocation8 + $0x30] sm:$0xf]
          %v490 = vld [vmem:[#allocation8 + $0x34] sm:$0xf]
          %v491 = vld [vmem:[#allocation8 + $0x38] sm:$0xf]
          %v492 = vld [vmem:[#allocation8 + $0x3c] sm:$0xf]
          %v493 = vld [vmem:[%s4] sm:$0x1]
          %v495 = vlaneseq
          %v496 = vshrl.u32 %v495, 7
          %v497 = vsub.s32 0, %v496
          %v498 = vrot.slane %v493, %v497
          %v516 = vunpack.c.l.b16 %v477
          %v517 = vunpack.c.l.b16 %v478
          %v518 = vunpack.c.l.b16 %v479
          %v519 = vunpack.c.l.b16 %v480
          %v520 = vunpack.c.l.b16 %v481
          %v521 = vunpack.c.l.b16 %v482
          %v522 = vunpack.c.l.b16 %v483
          %v523 = vunpack.c.l.b16 %v484
          %v524 = vunpack.c.l.b16 %v485
          %v525 = vunpack.c.l.b16 %v486
          %v526 = vunpack.c.l.b16 %v487
          %v527 = vunpack.c.l.b16 %v488
          %v528 = vunpack.c.l.b16 %v489
          %v529 = vunpack.c.l.b16 %v490
          %v530 = vunpack.c.l.b16 %v491
          %v531 = vunpack.c.l.b16 %v492
          %v532 = vpack.c.b16 %v517, %v516
          %v533 = vpack.c.b16 %v519, %v518
          %v534 = vpack.c.b16 %v521, %v520
          %v535 = vpack.c.b16 %v523, %v522
          %v536 = vpack.c.b16 %v525, %v524
          %v537 = vpack.c.b16 %v527, %v526
          %v538 = vpack.c.b16 %v529, %v528
          %v539 = vpack.c.b16 %v531, %v530
          %548 = vmatprep.subr.bf16.mxu0 0
          %549 = vmatpush1.bf16.msra.mxu0 %v539
          %550 = vmatprep.subr.bf16.mxu0 0
          %551 = vmatpush1.bf16.msra.mxu0 %v538
          %552 = vmatprep.subr.bf16.mxu0 0
          %553 = vmatpush1.bf16.msra.mxu0 %v537
          %554 = vmatprep.subr.bf16.mxu0 0
          %555 = vmatpush1.bf16.msra.mxu0 %v536
          %556 = vmatprep.subr.bf16.mxu0 0
          %557 = vmatpush1.bf16.msra.mxu0 %v535
          %558 = vmatprep.subr.bf16.mxu0 0
          %559 = vmatpush1.bf16.msra.mxu0 %v534
          %560 = vmatprep.subr.bf16.mxu0 0
          %561 = vmatpush1.bf16.msra.mxu0 %v533
          %562 = vmatprep.subr.bf16.mxu0 0
          %563 = vmatpush1.bf16.msra.mxu0 %v532
          %564 = vmatprep.subr.bf16.mxu0 0
          %565 = vmatpush2.bf16.msra.mxu0 0
          %566 = vmatprep.subr.bf16.mxu0 0
          %567 = vmatpush2.bf16.msra.mxu0 0
          %568 = vmatprep.subr.bf16.mxu0 0
          %569 = vmatpush2.bf16.msra.mxu0 0
          %570 = vmatprep.subr.bf16.mxu0 0
          %571 = vmatpush2.bf16.msra.mxu0 0
          %572 = vmatprep.subr.bf16.mxu0 0
          %573 = vmatpush2.bf16.msra.mxu0 0
          %574 = vmatprep.subr.bf16.mxu0 0
          %575 = vmatpush2.bf16.msra.mxu0 0
          %576 = vmatprep.subr.bf16.mxu0 0
          %577 = vmatpush2.bf16.msra.mxu0 0
          %578 = vmatprep.subr.bf16.mxu0 0
          %579 = vmatpush2.bf16.msra.mxu0 0
          %580 = vmatprep.mubr.bf16.mxu0 0
          %581 = vmatmul.mubr.bf16.gmra.mxu0 %v476
          %v582 = vpop.f32.mrf.mxu0
          %v583 = vadd.f32 %v498, %v582
          %v584 = vpop.f32.mrf.mxu0
          %v585 = vpop.f32.mrf.mxu0
          %v586 = vadd.f32 %v498, %v585
          %v587 = vpop.f32.mrf.mxu0
          %588 = vdwg.mxu0
          %v589 = vmax.f32 %v583, 0.0
          %v590 = vmax.f32 %v586, 0.0
          %v591 = vpack.c.bf16 %v590, %v589
          %v593 = vunpack.c.l.b16 %v591
          %v594 = vunpack.c.h.b16 %v591
          %v595 = vpack.c.b16 %v593, %v593
          %v596 = vpack.c.b16 %v594, %v594
          %599 = vst [vmem:[#allocation2] sm:$0xf] %v595
          %600 = vst [vmem:[#allocation2 + $0x4] sm:$0xf] %v596
        $region68: #{tpu_custom_call.1} parent=47 // pred_fallthru
          _
        %v601 = vld [vmem:[#allocation2] sm:$0xf]
        %v602 = vld [vmem:[#allocation2 + $0x4] sm:$0xf]
        %v603 = vld [vmem:[#allocation9] sm:$0xf]
        %v604 = vld [vmem:[#allocation9 + $0x4] sm:$0xf]
        %v605 = vld [vmem:[#allocation9 + $0x8] sm:$0xf]
        %v606 = vld [vmem:[#allocation9 + $0xc] sm:$0xf]
        %v607 = vld [vmem:[#allocation9 + $0x10] sm:$0xf]
        %v608 = vld [vmem:[#allocation9 + $0x14] sm:$0xf]
        %v609 = vld [vmem:[#allocation9 + $0x18] sm:$0xf]
        %v610 = vld [vmem:[#allocation9 + $0x1c] sm:$0xf]
        %v611 = vld [vmem:[#allocation9 + $0x20] sm:$0xf]
        %v612 = vld [vmem:[#allocation9 + $0x24] sm:$0xf]
        %v613 = vld [vmem:[#allocation9 + $0x28] sm:$0xf]
        %v614 = vld [vmem:[#allocation9 + $0x2c] sm:$0xf]
        %v615 = vld [vmem:[#allocation9 + $0x30] sm:$0xf]
        %v616 = vld [vmem:[#allocation9 + $0x34] sm:$0xf]
        %v617 = vld [vmem:[#allocation9 + $0x38] sm:$0xf]
        %v618 = vld [vmem:[#allocation9 + $0x3c] sm:$0xf]
        %v619 = vld [vmem:[%s376] sm:$0x1]
        %v621 = vlaneseq
        %v622 = vshrl.u32 %v621, 7
        %v623 = vsub.s32 0, %v622
        %v624 = vrot.slane %v619, %v623
        %v628 = vunpack.c.l.b16 %v601
        %v629 = vunpack.c.l.b16 %v602
        %v630 = vpack.c.b16 %v629, %v628
        %v648 = vunpack.c.l.b16 %v603
        %v649 = vunpack.c.l.b16 %v604
        %v650 = vunpack.c.l.b16 %v605
        %v651 = vunpack.c.l.b16 %v606
        %v652 = vunpack.c.l.b16 %v607
        %v653 = vunpack.c.l.b16 %v608
        %v654 = vunpack.c.l.b16 %v609
        %v655 = vunpack.c.l.b16 %v610
        %v656 = vunpack.c.l.b16 %v611
        %v657 = vunpack.c.l.b16 %v612
        %v658 = vunpack.c.l.b16 %v613
        %v659 = vunpack.c.l.b16 %v614
        %v660 = vunpack.c.l.b16 %v615
        %v661 = vunpack.c.l.b16 %v616
        %v662 = vunpack.c.l.b16 %v617
        %v663 = vunpack.c.l.b16 %v618
        %v664 = vpack.c.b16 %v649, %v648
        %v665 = vpack.c.b16 %v651, %v650
        %v666 = vpack.c.b16 %v653, %v652
        %v667 = vpack.c.b16 %v655, %v654
        %v668 = vpack.c.b16 %v657, %v656
        %v669 = vpack.c.b16 %v659, %v658
        %v670 = vpack.c.b16 %v661, %v660
        %v671 = vpack.c.b16 %v663, %v662
        %680 = vmatprep.subr.bf16.mxu0 0
        %681 = vmatpush1.bf16.msra.mxu0 %v671
        %682 = vmatprep.subr.bf16.mxu0 0
        %683 = vmatpush1.bf16.msra.mxu0 %v670
        %684 = vmatprep.subr.bf16.mxu0 0
        %685 = vmatpush1.bf16.msra.mxu0 %v669
        %686 = vmatprep.subr.bf16.mxu0 0
        %687 = vmatpush1.bf16.msra.mxu0 %v668
        %688 = vmatprep.subr.bf16.mxu0 0
        %689 = vmatpush1.bf16.msra.mxu0 %v667
        %690 = vmatprep.subr.bf16.mxu0 0
        %691 = vmatpush1.bf16.msra.mxu0 %v666
        %692 = vmatprep.subr.bf16.mxu0 0
        %693 = vmatpush1.bf16.msra.mxu0 %v665
        %694 = vmatprep.subr.bf16.mxu0 0
        %695 = vmatpush1.bf16.msra.mxu0 %v664
        %696 = vmatprep.subr.bf16.mxu0 0
        %697 = vmatpush2.bf16.msra.mxu0 0
        %698 = vmatprep.subr.bf16.mxu0 0
        %699 = vmatpush2.bf16.msra.mxu0 0
        %700 = vmatprep.subr.bf16.mxu0 0
        %701 = vmatpush2.bf16.msra.mxu0 0
        %702 = vmatprep.subr.bf16.mxu0 0
        %703 = vmatpush2.bf16.msra.mxu0 0
        %704 = vmatprep.subr.bf16.mxu0 0
        %705 = vmatpush2.bf16.msra.mxu0 0
        %706 = vmatprep.subr.bf16.mxu0 0
        %707 = vmatpush2.bf16.msra.mxu0 0
        %708 = vmatprep.subr.bf16.mxu0 0
        %709 = vmatpush2.bf16.msra.mxu0 0
        %710 = vmatprep.subr.bf16.mxu0 0
        %711 = vmatpush2.bf16.msra.mxu0 0
        %712 = vmatprep.mubr.bf16.mxu0 0
        %713 = vmatmul.mubr.bf16.gmra.mxu0 %v630
        %v714 = vpop.f32.mrf.mxu0
        %v715 = vadd.f32 %v624, %v714
        %v716 = vpop.f32.mrf.mxu0
        %v717 = vpop.f32.mrf.mxu0
        %v718 = vadd.f32 %v624, %v717
        %v719 = vpop.f32.mrf.mxu0
        %720 = vdwg.mxu0
        %721 = vst [vmem:[%s372] sm:$0xff] %v715
        %722 = vst [vmem:[%s372 + $0x8] sm:$0xff] %v718
        %s723 = sand.u32 %s210, 1
        %s724 = scalar_lea.sflag [#allocation5], %s723
        %s725 = sand.u32 %s210, 1
        %s726 = smul.addr %s725, 16
        %s727 = scalar_lea.vmem [#allocation11], %s726
        // Predicated region
        $region69: #{tpu_custom_call.1} parent=47 // pred_check
          %p728 = pneg %p220
        $region70: #{tpu_custom_call.1} parent=47 // pred_check_branch
          %730 = sbr.rel (%p728) target = $region72
        $region71: #{tpu_custom_call.1} parent=47 // pred_region
          %s731 = smul.u32 2, %s30
          %s733 = ssub.s32 256, 256
          %734 = vsyncadd %s724, %s733
          %s735 = sadd.s32 %s31, %s731
          %s736 = smul.addr %s735, 128
          %s737 = scalar_lea.hbm %s7, %s736
          %s738 = sshll.u32 %s727, 4
          %s739 = int_to_ptr.vmem [resolvable:$true] %s738
          %744 = dma.vmem_to_hbm [thread:$0]  %s739, 256, %s737, %s724, 128, 128, 8
        $region72: #{tpu_custom_call.1} parent=47 // pred_fallthru
          _
      $region48: #{tpu_custom_call.1} parent=5 // pred_fallthru
        _
      %p745 = scmp.le.s32.totalorder 2, %s21
      // Predicated region
      $region73: #{tpu_custom_call.1} parent=5 // pred_check
        %p746 = pneg %p745
      $region74: #{tpu_custom_call.1} parent=5 // pred_check_branch
        %748 = sbr.rel (%p746) target = $region76
      $region75: #{tpu_custom_call.1} parent=5 // pred_region
        %s749 = ssub.s32 %s21, 2
        // Predicated region
        $region77: #{tpu_custom_call.1} parent=75 // pred_check
          %p750 = pneg %p226
        $region78: #{tpu_custom_call.1} parent=75 // pred_check_branch
          %752 = sbr.rel (%p750) target = $region80
        $region79: #{tpu_custom_call.1} parent=75 // pred_region
          %s753 = sand.u32 %s211, 1
          %s754 = scalar_lea.sflag [#allocation5], %s753
          %s755 = sand.u32 %s211, 1
          %s756 = smul.addr %s755, 16
          %s757 = scalar_lea.vmem [#allocation11], %s756
          %758 = dma.done %s754, 256
        $region80: #{tpu_custom_call.1} parent=75 // pred_fallthru
          _
      $region76: #{tpu_custom_call.1} parent=5 // pred_fallthru
        _
    $region6: #{tpu_custom_call.1} parent=1 // loop_footer
      %s25 = sadd.s32 1, %s21
    $region7: #{tpu_custom_call.1} parent=1 // loop_footer_branch
      %20 = sbr.rel target = $region3
    $region8: #{tpu_custom_call.1} parent=1 // loop_exit
      _
    %759 = vsyncpa [#allocation4], 1
    %s760 = scalar_lea.sflag [#allocation4], 1
    %761 = vsyncpa %s760, 1
    %762 = vsyncpa [#allocation7], 1
    %763 = vsyncpa [#allocation10], 1
    %764 = vsyncpa [#allocation5], 1
    %s765 = scalar_lea.sflag [#allocation5], 1
    %766 = vsyncpa %s765, 1

// kernel: tpu_custom_call.1
$region0: #{tpu_custom_call.1}
  #allocation0 [shape = 'u32[]', space=smem, size = 0x4, offset = 0x4, fixed_abs, tag = 'smem constant byte address 0x4 - core index']
  #allocation1 [shape = 'u32[144,128]{1,0:T(1,128)}', space=vmem, size = 0x12000, scoped, tag = 'internal scratch']
  #allocation2 [shape = 'bf16[16,128]{1,0:T(8,128)(2,1)}', space=vmem, size = 0x1000, scoped, tag = 'scratch operand']
  %s0 = inlined_call_operand.hbm [shape: bf16[32,64], index: 0, kind: input, shape index: {}]
  %s1 = inlined_call_operand.hbm [shape: bf16[64,128], index: 1, kind: input, shape index: {}]
  %s2 = inlined_call_operand.vmem [shape: f32[1,128], index: 2, kind: input, shape index: {}]
  %s3 = inlined_call_operand.hbm [shape: bf16[128,128], index: 3, kind: input, shape index: {}]
  %s4 = inlined_call_operand.vmem [shape: f32[1,128], index: 4, kind: input, shape index: {}]
  %s5 = inlined_call_operand.hbm [shape: bf16[128,128], index: 5, kind: input, shape index: {}]
  %s6 = inlined_call_operand.vmem [shape: f32[1,128], index: 6, kind: input, shape index: {}]
  %s7 = inlined_call_operand.hbm [shape: f32[32,128], index: 7, kind: output, shape index: {}]
  %s8 = sld [smem:[#allocation0]]
  $region81: #{tpu_custom_call.1} parent=0
    _
  %s10 = ssub.s32 1, %s8
  %s11 = scalar_select 0, %s10, %s8
  $region1: #{tpu_custom_call.1} parent=0
    #allocation3 [shape = 'u8[8192]{0}', space=vmem, size = 0x2000, scoped, tag = 'input window, operand 0']
    #allocation4 [shape = 's32[2]{0}', space=sflag, size = 0x8, scoped, tag = 'scoped memory for tpu_custom_call.1']
    #allocation5 [shape = 's32[2]{0}', space=sflag, size = 0x8, scoped, tag = 'scoped memory for tpu_custom_call.1']
    #allocation6 [shape = 'u8[16384]{0}', space=vmem, size = 0x4000, scoped, tag = 'input window, operand 1, single buffered']
    #allocation7 [shape = 's32[1]{0}', space=sflag, size = 0x4, scoped, tag = 'scoped memory for tpu_custom_call.1']
    #allocation8 [shape = 'u8[32768]{0}', space=vmem, size = 0x8000, scoped, tag = 'input window, operand 3, single buffered']
    #allocation9 [shape = 'u8[32768]{0}', space=vmem, size = 0x8000, scoped, tag = 'input window, operand 5, single buffered']
    #allocation10 [shape = 's32[1]{0}', space=sflag, size = 0x4, scoped, tag = 'scoped memory for tpu_custom_call.1']
    #allocation11 [shape = 'u8[16384]{0}', space=vmem, size = 0x4000, scoped, tag = 'output window, operand 0']
    %12 = vsyncpa [#allocation4], 0
    %s13 = scalar_lea.sflag [#allocation4], 1
    %14 = vsyncpa %s13, 0
    %15 = vsyncpa [#allocation7], 0
    %16 = vsyncpa [#allocation10], 0
    %17 = vsyncpa [#allocation5], 0
    %s18 = scalar_lea.sflag [#allocation5], 1
    %19 = vsyncpa %s18, 0
    loop: start=0, step=1, limit=4
    $region2: #{tpu_custom_call.1} parent=1 // loop_pre_header
      _
    $region3: #{tpu_custom_call.1} parent=1 // loop_header
      %s21 = sphi 0, %s25
      %p22 = scmp.ge.s32.totalorder %s21, 4
      %s28 = sphi 0, %s40
      %s29 = sphi 0, %s36
      %s30 = sphi 0, %s28
      %s31 = sphi 0, %s29
      %s32 = sphi 0, %s30
      %s33 = sphi 0, %s31
      %s43 = sphi 0, %s45
      %s46 = sphi 0, %s43
      %s47 = sphi 0, %s46
      %s63 = sphi 0, %s47
      %s67 = sphi 0, %s67
      %s69 = sphi 0, %s67
      %s70 = sphi 0, %s69
      %s84 = sphi 0, %s70
      %s88 = sphi 0, %s88
      %s90 = sphi 0, %s88
      %s91 = sphi 0, %s90
      %s105 = sphi 0, %s91
      %s109 = sphi 0, %s109
      %s111 = sphi 0, %s109
      %s112 = sphi 0, %s111
      %s126 = sphi 0, %s112
      %s130 = sphi 0, %s130
      %s132 = sphi 0, %s130
      %s133 = sphi 0, %s132
      %s147 = sphi 0, %s133
      %s153 = sphi 0, %s155
      %s156 = sphi 0, %s153
      %s157 = sphi 0, %s156
      %s173 = sphi 0, %s157
      %s179 = sphi 0, %s181
      %s182 = sphi 0, %s179
      %s183 = sphi 0, %s182
      %s199 = sphi 0, %s183
      %s207 = sphi 0, %s209
      %s210 = sphi 0, %s207
      %s211 = sphi 0, %s210
      %s227 = sphi 0, %s211
    $region4: #{tpu_custom_call.1} parent=1 // loop_header_branch
      %24 = sbr.rel (%p22) target = $region8
    $region5: #{tpu_custom_call.1} parent=1 // loop_body
      %s26 = ssub.s32 %s21, 1
      %s27 = ssub.s32 %s21, 2
      %s34 = sadd.s32 1, %s29
      %p35 = scmp.ge.s32.totalorder %s34, 1
      %s36 = scalar_select %p35, 0, %s34
      %s37 = sadd.s32 1, %s28
      %s38 = scalar_select %p35, %s37, %s28
      %p39 = scmp.ge.s32.totalorder %s38, 2
      %s40 = scalar_select %p39, 0, %s38
      %s41 = ssub.s32 %s28, %s40
      %p42 = scmp.eq.s32.totalorder %s41, 0
      %s44 = sadd.s32 %s43, 1
      %s45 = scalar_select %p42, %s43, %s44
      %p48 = pneg %p42
      %p49 = scmp.eq.s32.totalorder %s21, 1
      %p50 = por %p48, %p49
      %p51 = scmp.ne.s32.totalorder %s43, %s46
      %p52 = scmp.eq.s32.totalorder %s21, 0
      %p53 = por %p51, %p52
      %p54 = scmp.ne.s32.totalorder %s43, %s46
      %p55 = scmp.eq.s32.totalorder %s26, 1
      %p56 = por %p54, %p55
      %p57 = scmp.ne.s32.totalorder %s46, %s47
      %p58 = scmp.eq.s32.totalorder %s26, 0
      %p59 = por %p57, %p58
      %p60 = scmp.ne.s32.totalorder %s46, %s47
      %p61 = scmp.eq.s32.totalorder %s27, 1
      %p62 = por %p60, %p61
      %p64 = scmp.ne.s32.totalorder %s47, %s63
      %p65 = scmp.eq.s32.totalorder %s27, 0
      %p66 = por %p64, %p65
      %s68 = sadd.s32 %s67, 1
      %p71 = scmp.eq.s32.totalorder %s21, 1
      %p72 = scmp.ne.s32.totalorder %s67, %s69
      %p73 = scmp.eq.s32.totalorder %s21, 0
      %p74 = por %p72, %p73
      %p75 = scmp.ne.s32.totalorder %s67, %s69
      %p76 = scmp.eq.s32.totalorder %s26, 1
      %p77 = por %p75, %p76
      %p78 = scmp.ne.s32.totalorder %s69, %s70
      %p79 = scmp.eq.s32.totalorder %s26, 0
      %p80 = por %p78, %p79
      %p81 = scmp.ne.s32.totalorder %s69, %s70
      %p82 = scmp.eq.s32.totalorder %s27, 1
      %p83 = por %p81, %p82
      %p85 = scmp.ne.s32.totalorder %s70, %s84
      %p86 = scmp.eq.s32.totalorder %s27, 0
      %p87 = por %p85, %p86
      %s89 = sadd.s32 %s88, 1
      %p92 = scmp.eq.s32.totalorder %s21, 1
      %p93 = scmp.ne.s32.totalorder %s88, %s90
      %p94 = scmp.eq.s32.totalorder %s21, 0
      %p95 = por %p93, %p94
      %p96 = scmp.ne.s32.totalorder %s88, %s90
      %p97 = scmp.eq.s32.totalorder %s26, 1
      %p98 = por %p96, %p97
      %p99 = scmp.ne.s32.totalorder %s90, %s91
      %p100 = scmp.eq.s32.totalorder %s26, 0
      %p101 = por %p99, %p100
      %p102 = scmp.ne.s32.totalorder %s90, %s91
      %p103 = scmp.eq.s32.totalorder %s27, 1
      %p104 = por %p102, %p103
      %p106 = scmp.ne.s32.totalorder %s91, %s105
      %p107 = scmp.eq.s32.totalorder %s27, 0
      %p108 = por %p106, %p107
      %s110 = sadd.s32 %s109, 1
      %p113 = scmp.eq.s32.totalorder %s21, 1
      %p114 = scmp.ne.s32.totalorder %s109, %s111
      %p115 = scmp.eq.s32.totalorder %s21, 0
      %p116 = por %p114, %p115
      %p117 = scmp.ne.s32.totalorder %s109, %s111
      %p118 = scmp.eq.s32.totalorder %s26, 1
      %p119 = por %p117, %p118
      %p120 = scmp.ne.s32.totalorder %s111, %s112
      %p121 = scmp.eq.s32.totalorder %s26, 0
      %p122 = por %p120, %p121
      %p123 = scmp.ne.s32.totalorder %s111, %s112
      %p124 = scmp.eq.s32.totalorder %s27, 1
      %p125 = por %p123, %p124
      %p127 = scmp.ne.s32.totalorder %s112, %s126
      %p128 = scmp.eq.s32.totalorder %s27, 0
      %p129 = por %p127, %p128
      %s131 = sadd.s32 %s130, 1
      %p134 = scmp.eq.s32.totalorder %s21, 1
      %p135 = scmp.ne.s32.totalorder %s130, %s132
      %p136 = scmp.eq.s32.totalorder %s21, 0
      %p137 = por %p135, %p136
      %p138 = scmp.ne.s32.totalorder %s130, %s132
      %p139 = scmp.eq.s32.totalorder %s26, 1
      %p140 = por %p138, %p139
      %p141 = scmp.ne.s32.totalorder %s132, %s133
      %p142 = scmp.eq.s32.totalorder %s26, 0
      %p143 = por %p141, %p142
      %p144 = scmp.ne.s32.totalorder %s132, %s133
      %p145 = scmp.eq.s32.totalorder %s27, 1
      %p146 = por %p144, %p145
      %p148 = scmp.ne.s32.totalorder %s133, %s147
      %p149 = scmp.eq.s32.totalorder %s27, 0
      %p150 = por %p148, %p149
      %s151 = ssub.s32 %s29, %s36
      %p152 = scmp.eq.s32.totalorder %s151, 0
      %s154 = sadd.s32 %s153, 1
      %s155 = scalar_select %p152, %s153, %s154
      %p158 = pneg %p152
      %p159 = scmp.eq.s32.totalorder %s21, 1
      %p160 = por %p158, %p159
      %p161 = scmp.ne.s32.totalorder %s153, %s156
      %p162 = scmp.eq.s32.totalorder %s21, 0
      %p163 = por %p161, %p162
      %p164 = scmp.ne.s32.totalorder %s153, %s156
      %p165 = scmp.eq.s32.totalorder %s26, 1
      %p166 = por %p164, %p165
      %p167 = scmp.ne.s32.totalorder %s156, %s157
      %p168 = scmp.eq.s32.totalorder %s26, 0
      %p169 = por %p167, %p168
      %p170 = scmp.ne.s32.totalorder %s156, %s157
      %p171 = scmp.eq.s32.totalorder %s27, 1
      %p172 = por %p170, %p171
      %p174 = scmp.ne.s32.totalorder %s157, %s173
      %p175 = scmp.eq.s32.totalorder %s27, 0
      %p176 = por %p174, %p175
      %s177 = ssub.s32 %s29, %s36
      %p178 = scmp.eq.s32.totalorder %s177, 0
      %s180 = sadd.s32 %s179, 1
      %s181 = scalar_select %p178, %s179, %s180
      %p184 = pneg %p178
      %p185 = scmp.eq.s32.totalorder %s21, 1
      %p186 = por %p184, %p185
      %p187 = scmp.ne.s32.totalorder %s179, %s182
      %p188 = scmp.eq.s32.totalorder %s21, 0
      %p189 = por %p187, %p188
      %p190 = scmp.ne.s32.totalorder %s179, %s182
      %p191 = scmp.eq.s32.totalorder %s26, 1
      %p192 = por %p190, %p191
      %p193 = scmp.ne.s32.totalorder %s182, %s183
      %p194 = scmp.eq.s32.totalorder %s26, 0
      %p195 = por %p193, %p194
      %p196 = scmp.ne.s32.totalorder %s182, %s183
      %p197 = scmp.eq.s32.totalorder %s27, 1
      %p198 = por %p196, %p197
      %p200 = scmp.ne.s32.totalorder %s183, %s199
      %p201 = scmp.eq.s32.totalorder %s27, 0
      %p202 = por %p200, %p201
      %s203 = ssub.s32 %s28, %s40
      %s204 = ssub.s32 %s29, %s36
      %s205 = sor.u32 %s203, %s204
      %p206 = scmp.eq.s32.totalorder %s205, 0
      %s208 = sadd.s32 %s207, 1
      %s209 = scalar_select %p206, %s207, %s208
      %p212 = pneg %p206
      %p213 = scmp.eq.s32.totalorder %s21, 1
      %p214 = por %p212, %p213
      %p215 = scmp.ne.s32.totalorder %s207, %s210
      %p216 = scmp.eq.s32.totalorder %s21, 0
      %p217 = por %p215, %p216
      %p218 = scmp.ne.s32.totalorder %s207, %s210
      %p219 = scmp.eq.s32.totalorder %s26, 1
      %p220 = por %p218, %p219
      %p221 = scmp.ne.s32.totalorder %s210, %s211
      %p222 = scmp.eq.s32.totalorder %s26, 0
      %p223 = por %p221, %p222
      %p224 = scmp.ne.s32.totalorder %s210, %s211
      %p225 = scmp.eq.s32.totalorder %s27, 1
      %p226 = por %p224, %p225
      %p228 = scmp.ne.s32.totalorder %s211, %s227
      %p229 = scmp.eq.s32.totalorder %s27, 0
      %p230 = por %p228, %p229
      %p231 = scmp.le.s32.totalorder 1, %s21
      %p232 = scmp.lt.s32.totalorder %s21, 3
      %p233 = pnand %p231, %p232
      %p234 = pneg %p233
      // Predicated region
      $region9: #{tpu_custom_call.1} parent=5 // pred_check
        _
      $region10: #{tpu_custom_call.1} parent=5 // pred_check_branch
        %236 = sbr.rel (%p233) target = $region12
      $region11: #{tpu_custom_call.1} parent=5 // pred_region
        %s237 = ssub.s32 %s21, 1
        // Predicated region
        $region13: #{tpu_custom_call.1} parent=11 // pred_check
          %p238 = pneg %p80
        $region14: #{tpu_custom_call.1} parent=11 // pred_check_branch
          %240 = sbr.rel (%p238) target = $region16
        $region15: #{tpu_custom_call.1} parent=11 // pred_region
          %s242 = ssub.s32 512, 512
          %243 = vsyncadd [#allocation7], %s242
          %s244 = sshll.u32 [#allocation6], 4
          %s245 = int_to_ptr.vmem [resolvable:$true] %s244
          %250 = dma.hbm_to_vmem [thread:$0]  %s1, 512, %s245, [#allocation7], 64, 64, 4
        $region16: #{tpu_custom_call.1} parent=11 // pred_fallthru
          _
        // Predicated region
        $region17: #{tpu_custom_call.1} parent=11 // pred_check
          %p251 = pneg %p101
        $region18: #{tpu_custom_call.1} parent=11 // pred_check_branch
          %253 = sbr.rel (%p251) target = $region20
        $region19: #{tpu_custom_call.1} parent=11 // pred_region
          _
        $region20: #{tpu_custom_call.1} parent=11 // pred_fallthru
          _
        // Predicated region
        $region21: #{tpu_custom_call.1} parent=11 // pred_check
          %p254 = pneg %p122
        $region22: #{tpu_custom_call.1} parent=11 // pred_check_branch
          %256 = sbr.rel (%p254) target = $region24
        $region23: #{tpu_custom_call.1} parent=11 // pred_region
          %s258 = ssub.s32 1024, 1024
          %259 = vsyncadd [#allocation7], %s258
          %s260 = sshll.u32 [#allocation8], 4
          %s261 = int_to_ptr.vmem [resolvable:$true] %s260
          %266 = dma.hbm_to_vmem [thread:$0]  %s3, 1024, %s261, [#allocation7], 64, 64, 4
        $region24: #{tpu_custom_call.1} parent=11 // pred_fallthru
          _
        // Predicated region
        $region25: #{tpu_custom_call.1} parent=11 // pred_check
          %p267 = pneg %p143
        $region26: #{tpu_custom_call.1} parent=11 // pred_check_branch
          %269 = sbr.rel (%p267) target = $region28
        $region27: #{tpu_custom_call.1} parent=11 // pred_region
          _
        $region28: #{tpu_custom_call.1} parent=11 // pred_fallthru
          _
        // Predicated region
        $region29: #{tpu_custom_call.1} parent=11 // pred_check
          %p270 = pneg %p169
        $region30: #{tpu_custom_call.1} parent=11 // pred_check_branch
          %272 = sbr.rel (%p270) target = $region32
        $region31: #{tpu_custom_call.1} parent=11 // pred_region
          %s274 = ssub.s32 1024, 1024
          %275 = vsyncadd [#allocation10], %s274
          %s276 = smul.addr %s31, 64
          %s277 = scalar_lea.hbm %s5, %s276
          %s278 = sshll.u32 [#allocation9], 4
          %s279 = int_to_ptr.vmem [resolvable:$true] %s278
          %284 = dma.hbm_to_vmem [thread:$0]  %s277, 1024, %s279, [#allocation10], 64, 64, 4
        $region32: #{tpu_custom_call.1} parent=11 // pred_fallthru
          _
        // Predicated region
        $region33: #{tpu_custom_call.1} parent=11 // pred_check
          %p285 = pneg %p195
        $region34: #{tpu_custom_call.1} parent=11 // pred_check_branch
          %287 = sbr.rel (%p285) target = $region36
        $region35: #{tpu_custom_call.1} parent=11 // pred_region
          %p288 = scmp.lt.s32.totalorder %s31, 0
          %s289 = scalar_select %p288, %s31, 0
          %s290 = scalar_lea.vmem %s6, %s289
        $region36: #{tpu_custom_call.1} parent=11 // pred_fallthru
          _
      $region12: #{tpu_custom_call.1} parent=5 // pred_fallthru
        _
      %p291 = scmp.lt.s32.totalorder %s21, 2
      // Predicated region
      $region37: #{tpu_custom_call.1} parent=5 // pred_check
        %p292 = pneg %p291
      $region38: #{tpu_custom_call.1} parent=5 // pred_check_branch
        %294 = sbr.rel (%p292) target = $region40
      $region39: #{tpu_custom_call.1} parent=5 // pred_region
        // Predicated region
        $region41: #{tpu_custom_call.1} parent=39 // pred_check
          %p295 = pneg %p53
        $region42: #{tpu_custom_call.1} parent=39 // pred_check_branch
          %297 = sbr.rel (%p295) target = $region44
        $region43: #{tpu_custom_call.1} parent=39 // pred_region
          %s298 = sand.u32 %s43, 1
          %s299 = scalar_lea.sflag [#allocation4], %s298
          %s300 = sand.u32 %s43, 1
          %s301 = smul.addr %s300, 8
          %s302 = scalar_lea.vmem [#allocation3], %s301
          %s303 = smul.u32 2, %s28
          %s305 = ssub.s32 128, 128
          %306 = vsyncadd %s299, %s305
          %s307 = smul.addr %s303, 64
          %s308 = scalar_lea.hbm %s0, %s307
          %s309 = sshll.u32 %s302, 4
          %s310 = int_to_ptr.vmem [resolvable:$true] %s309
          %315 = dma.hbm_to_vmem [thread:$0]  %s308, 128, %s310, %s299, 64, 64, 4
        $region44: #{tpu_custom_call.1} parent=39 // pred_fallthru
          _
      $region40: #{tpu_custom_call.1} parent=5 // pred_fallthru
        _
      %p316 = scmp.le.s32.totalorder 1, %s21
      %p317 = scmp.lt.s32.totalorder %s21, 3
      %p318 = pnand %p316, %p317
      %p319 = pneg %p318
      // Predicated region
      $region45: #{tpu_custom_call.1} parent=5 // pred_check
        _
      $region46: #{tpu_custom_call.1} parent=5 // pred_check_branch
        %321 = sbr.rel (%p318) target = $region48
      $region47: #{tpu_custom_call.1} parent=5 // pred_region
        %s322 = ssub.s32 %s21, 1
        %s323 = sand.u32 %s46, 1
        %s324 = scalar_lea.sflag [#allocation4], %s323
        %s325 = sand.u32 %s46, 1
        %s326 = smul.addr %s325, 8
        %s327 = scalar_lea.vmem [#allocation3], %s326
        // Predicated region
        $region49: #{tpu_custom_call.1} parent=47 // pred_check
          %p328 = pneg %p59
        $region50: #{tpu_custom_call.1} parent=47 // pred_check_branch
          %330 = sbr.rel (%p328) target = $region52
        $region51: #{tpu_custom_call.1} parent=47 // pred_region
          %331 = dma.done %s324, 128
        $region52: #{tpu_custom_call.1} parent=47 // pred_fallthru
          _
        // Predicated region
        $region53: #{tpu_custom_call.1} parent=47 // pred_check
          %p332 = pneg %p80
        $region54: #{tpu_custom_call.1} parent=47 // pred_check_branch
          %334 = sbr.rel (%p332) target = $region56
        $region55: #{tpu_custom_call.1} parent=47 // pred_region
          %335 = dma.done [#allocation7], 512
        $region56: #{tpu_custom_call.1} parent=47 // pred_fallthru
          _
        // Predicated region
        $region57: #{tpu_custom_call.1} parent=47 // pred_check
          %p336 = pneg %p122
        $region58: #{tpu_custom_call.1} parent=47 // pred_check_branch
          %338 = sbr.rel (%p336) target = $region60
        $region59: #{tpu_custom_call.1} parent=47 // pred_region
          %339 = dma.done [#allocation7], 1024
        $region60: #{tpu_custom_call.1} parent=47 // pred_fallthru
          _
        // Predicated region
        $region61: #{tpu_custom_call.1} parent=47 // pred_check
          %p340 = pneg %p169
        $region62: #{tpu_custom_call.1} parent=47 // pred_check_branch
          %342 = sbr.rel (%p340) target = $region64
        $region63: #{tpu_custom_call.1} parent=47 // pred_region
          %343 = dma.done [#allocation10], 1024
        $region64: #{tpu_custom_call.1} parent=47 // pred_fallthru
          _
        %s344 = sand.u32 %s46, 1
        %s345 = scalar_lea.sflag [#allocation4], %s344
        %s346 = sand.u32 %s46, 1
        %s347 = smul.addr %s346, 8
        %s348 = scalar_lea.vmem [#allocation3], %s347
        %p349 = pneg %p59
        %p350 = pneg %p56
        %p351 = pneg %p80
        %p352 = pneg %p77
        %p353 = pneg %p101
        %p354 = pneg %p98
        %p355 = pneg %p122
        %p356 = pneg %p119
        %p357 = pneg %p143
        %p358 = pneg %p140
        %p359 = pneg %p169
        %p360 = pneg %p166
        %p361 = scmp.lt.s32.totalorder %s31, 0
        %s362 = scalar_select %p361, %s31, 0
        %s363 = scalar_lea.vmem %s6, %s362
        %p364 = pneg %p195
        %p365 = pneg %p192
        %p366 = pneg %p223
        %p367 = pneg %p220
        %s368 = sand.u32 %s210, 1
        %s369 = scalar_lea.sflag [#allocation5], %s368
        %s370 = sand.u32 %s210, 1
        %s371 = smul.addr %s370, 16
        %s372 = scalar_lea.vmem [#allocation11], %s371
        %s373 = smul.u32 2, %s30
        %p374 = scmp.lt.s32.totalorder %s31, 0
        %s375 = scalar_select %p374, %s31, 0
        %s376 = scalar_lea.vmem %s6, %s375
        %s377 = smul.u32 2, %s30
        %p379 = scmp.eq.s32.totalorder %s31, 0
        // Predicated region
        $region65: #{tpu_custom_call.1} parent=47 // pred_check
          %p380 = pneg %p379
        $region66: #{tpu_custom_call.1} parent=47 // pred_check_branch
          %382 = sbr.rel (%p380) target = $region68
        $region67: #{tpu_custom_call.1} parent=47 // pred_region
          %v383 = vld [vmem:[%s327] sm:$0xf]
          %v384 = vld [vmem:[%s327 + $0x4] sm:$0xf]
          %v385 = vld [vmem:[#allocation6] sm:$0xf]
          %v386 = vld [vmem:[#allocation6 + $0x4] sm:$0xf]
          %v387 = vld [vmem:[#allocation6 + $0x8] sm:$0xf]
          %v388 = vld [vmem:[#allocation6 + $0xc] sm:$0xf]
          %v389 = vld [vmem:[#allocation6 + $0x10] sm:$0xf]
          %v390 = vld [vmem:[#allocation6 + $0x14] sm:$0xf]
          %v391 = vld [vmem:[#allocation6 + $0x18] sm:$0xf]
          %v392 = vld [vmem:[#allocation6 + $0x1c] sm:$0xf]
          %v393 = vld [vmem:[%s2] sm:$0x1]
          %v395 = vlaneseq
          %v396 = vshrl.u32 %v395, 7
          %v397 = vsub.s32 0, %v396
          %v398 = vrot.slane %v393, %v397
          %v402 = vunpack.c.l.b16 %v383
          %v403 = vunpack.c.l.b16 %v384
          %v404 = vpack.c.b16 %v403, %v402
          %v413 = vunpack.c.l.b16 %v385
          %v414 = vunpack.c.l.b16 %v386
          %v415 = vunpack.c.l.b16 %v387
          %v416 = vunpack.c.l.b16 %v388
          %v417 = vunpack.c.l.b16 %v389
          %v418 = vunpack.c.l.b16 %v390
          %v419 = vunpack.c.l.b16 %v391
          %v420 = vunpack.c.l.b16 %v392
          %v421 = vpack.c.b16 %v414, %v413
          %v422 = vpack.c.b16 %v416, %v415
          %v423 = vpack.c.b16 %v418, %v417
          %v424 = vpack.c.b16 %v420, %v419
          %vm429 = vcmask 523264
          %v431 = vsel %vm429, %v404, 0
          %433 = vmatprep.subr.bf16.mxu0 0
          %434 = vmatpush1.bf16.msra.mxu0 0
          %435 = vmatprep.subr.bf16.mxu0 0
          %436 = vmatpush1.bf16.msra.mxu0 0
          %437 = vmatprep.subr.bf16.mxu0 0
          %438 = vmatpush1.bf16.msra.mxu0 0
          %439 = vmatprep.subr.bf16.mxu0 0
          %440 = vmatpush1.bf16.msra.mxu0 0
          %441 = vmatprep.subr.bf16.mxu0 0
          %442 = vmatpush1.bf16.msra.mxu0 %v424
          %443 = vmatprep.subr.bf16.mxu0 0
          %444 = vmatpush1.bf16.msra.mxu0 %v423
          %445 = vmatprep.subr.bf16.mxu0 0
          %446 = vmatpush1.bf16.msra.mxu0 %v422
          %447 = vmatprep.subr.bf16.mxu0 0
          %448 = vmatpush1.bf16.msra.mxu0 %v421
          %449 = vmatprep.subr.bf16.mxu0 0
          %450 = vmatpush2.bf16.msra.mxu0 0
          %451 = vmatprep.subr.bf16.mxu0 0
          %452 = vmatpush2.bf16.msra.mxu0 0
          %453 = vmatprep.subr.bf16.mxu0 0
          %454 = vmatpush2.bf16.msra.mxu0 0
          %455 = vmatprep.subr.bf16.mxu0 0
          %456 = vmatpush2.bf16.msra.mxu0 0
          %457 = vmatprep.subr.bf16.mxu0 0
          %458 = vmatpush2.bf16.msra.mxu0 0
          %459 = vmatprep.subr.bf16.mxu0 0
          %460 = vmatpush2.bf16.msra.mxu0 0
          %461 = vmatprep.subr.bf16.mxu0 0
          %462 = vmatpush2.bf16.msra.mxu0 0
          %463 = vmatprep.subr.bf16.mxu0 0
          %464 = vmatpush2.bf16.msra.mxu0 0
          %465 = vmatprep.mubr.bf16.mxu0 0
          %466 = vmatmul.mubr.bf16.gmra.mxu0 %v431
          %v467 = vpop.f32.mrf.mxu0
          %v468 = vadd.f32 %v398, %v467
          %v469 = vpop.f32.mrf.mxu0
          %v470 = vpop.f32.mrf.mxu0
          %v471 = vadd.f32 %v398, %v470
          %v472 = vpop.f32.mrf.mxu0
          %473 = vdwg.mxu0
          %v474 = vmax.f32 %v468, 0.0
          %v475 = vmax.f32 %v471, 0.0
          %v476 = vpack.c.bf16 %v475, %v474
          %v477 = vld [vmem:[#allocation8] sm:$0xf]
          %v478 = vld [vmem:[#allocation8 + $0x4] sm:$0xf]
          %v479 = vld [vmem:[#allocation8 + $0x8] sm:$0xf]
          %v480 = vld [vmem:[#allocation8 + $0xc] sm:$0xf]
          %v481 = vld [vmem:[#allocation8 + $0x10] sm:$0xf]
          %v482 = vld [vmem:[#allocation8 + $0x14] sm:$0xf]
          %v483 = vld [vmem:[#allocation8 + $0x18] sm:$0xf]
          %v484 = vld [vmem:[#allocation8 + $0x1c] sm:$0xf]
          %v485 = vld [vmem:[#allocation8 + $0x20] sm:$0xf]
          %v486 = vld [vmem:[#allocation8 + $0x24] sm:$0xf]
          %v487 = vld [vmem:[#allocation8 + $0x28] sm:$0xf]
          %v488 = vld [vmem:[#allocation8 + $0x2c] sm:$0xf]
          %v489 = vld [vmem:[#allocation8 + $0x30] sm:$0xf]
          %v490 = vld [vmem:[#allocation8 + $0x34] sm:$0xf]
          %v491 = vld [vmem:[#allocation8 + $0x38] sm:$0xf]
          %v492 = vld [vmem:[#allocation8 + $0x3c] sm:$0xf]
          %v493 = vld [vmem:[%s4] sm:$0x1]
          %v495 = vlaneseq
          %v496 = vshrl.u32 %v495, 7
          %v497 = vsub.s32 0, %v496
          %v498 = vrot.slane %v493, %v497
          %v516 = vunpack.c.l.b16 %v477
          %v517 = vunpack.c.l.b16 %v478
          %v518 = vunpack.c.l.b16 %v479
          %v519 = vunpack.c.l.b16 %v480
          %v520 = vunpack.c.l.b16 %v481
          %v521 = vunpack.c.l.b16 %v482
          %v522 = vunpack.c.l.b16 %v483
          %v523 = vunpack.c.l.b16 %v484
          %v524 = vunpack.c.l.b16 %v485
          %v525 = vunpack.c.l.b16 %v486
          %v526 = vunpack.c.l.b16 %v487
          %v527 = vunpack.c.l.b16 %v488
          %v528 = vunpack.c.l.b16 %v489
          %v529 = vunpack.c.l.b16 %v490
          %v530 = vunpack.c.l.b16 %v491
          %v531 = vunpack.c.l.b16 %v492
          %v532 = vpack.c.b16 %v517, %v516
          %v533 = vpack.c.b16 %v519, %v518
          %v534 = vpack.c.b16 %v521, %v520
          %v535 = vpack.c.b16 %v523, %v522
          %v536 = vpack.c.b16 %v525, %v524
          %v537 = vpack.c.b16 %v527, %v526
          %v538 = vpack.c.b16 %v529, %v528
          %v539 = vpack.c.b16 %v531, %v530
          %548 = vmatprep.subr.bf16.mxu0 0
          %549 = vmatpush1.bf16.msra.mxu0 %v539
          %550 = vmatprep.subr.bf16.mxu0 0
          %551 = vmatpush1.bf16.msra.mxu0 %v538
          %552 = vmatprep.subr.bf16.mxu0 0
          %553 = vmatpush1.bf16.msra.mxu0 %v537
          %554 = vmatprep.subr.bf16.mxu0 0
          %555 = vmatpush1.bf16.msra.mxu0 %v536
          %556 = vmatprep.subr.bf16.mxu0 0
          %557 = vmatpush1.bf16.msra.mxu0 %v535
          %558 = vmatprep.subr.bf16.mxu0 0
          %559 = vmatpush1.bf16.msra.mxu0 %v534
          %560 = vmatprep.subr.bf16.mxu0 0
          %561 = vmatpush1.bf16.msra.mxu0 %v533
          %562 = vmatprep.subr.bf16.mxu0 0
          %563 = vmatpush1.bf16.msra.mxu0 %v532
          %564 = vmatprep.subr.bf16.mxu0 0
          %565 = vmatpush2.bf16.msra.mxu0 0
          %566 = vmatprep.subr.bf16.mxu0 0
          %567 = vmatpush2.bf16.msra.mxu0 0
          %568 = vmatprep.subr.bf16.mxu0 0
          %569 = vmatpush2.bf16.msra.mxu0 0
          %570 = vmatprep.subr.bf16.mxu0 0
          %571 = vmatpush2.bf16.msra.mxu0 0
          %572 = vmatprep.subr.bf16.mxu0 0
          %573 = vmatpush2.bf16.msra.mxu0 0
          %574 = vmatprep.subr.bf16.mxu0 0
          %575 = vmatpush2.bf16.msra.mxu0 0
          %576 = vmatprep.subr.bf16.mxu0 0
          %577 = vmatpush2.bf16.msra.mxu0 0
          %578 = vmatprep.subr.bf16.mxu0 0
          %579 = vmatpush2.bf16.msra.mxu0 0
          %580 = vmatprep.mubr.bf16.mxu0 0
          %581 = vmatmul.mubr.bf16.gmra.mxu0 %v476
          %v582 = vpop.f32.mrf.mxu0
          %v583 = vadd.f32 %v498, %v582
          %v584 = vpop.f32.mrf.mxu0
          %v585 = vpop.f32.mrf.mxu0
          %v586 = vadd.f32 %v498, %v585
          %v587 = vpop.f32.mrf.mxu0
          %588 = vdwg.mxu0
          %v589 = vmax.f32 %v583, 0.0
          %v590 = vmax.f32 %v586, 0.0
          %v591 = vpack.c.bf16 %v590, %v589
          %v593 = vunpack.c.l.b16 %v591
          %v594 = vunpack.c.h.b16 %v591
          %v595 = vpack.c.b16 %v593, %v593
          %v596 = vpack.c.b16 %v594, %v594
          %599 = vst [vmem:[#allocation2] sm:$0xf] %v595
          %600 = vst [vmem:[#allocation2 + $0x4] sm:$0xf] %v596
        $region68: #{tpu_custom_call.1} parent=47 // pred_fallthru
          _
        %v601 = vld [vmem:[#allocation2] sm:$0xf]
        %v602 = vld [vmem:[#allocation2 + $0x4] sm:$0xf]
        %v603 = vld [vmem:[#allocation9] sm:$0xf]
        %v604 = vld [vmem:[#allocation9 + $0x4] sm:$0xf]
        %v605 = vld [vmem:[#allocation9 + $0x8] sm:$0xf]
        %v606 = vld [vmem:[#allocation9 + $0xc] sm:$0xf]
        %v607 = vld [vmem:[#allocation9 + $0x10] sm:$0xf]
        %v608 = vld [vmem:[#allocation9 + $0x14] sm:$0xf]
        %v609 = vld [vmem:[#allocation9 + $0x18] sm:$0xf]
        %v610 = vld [vmem:[#allocation9 + $0x1c] sm:$0xf]
        %v611 = vld [vmem:[#allocation9 + $0x20] sm:$0xf]
        %v612 = vld [vmem:[#allocation9 + $0x24] sm:$0xf]
        %v613 = vld [vmem:[#allocation9 + $0x28] sm:$0xf]
        %v614 = vld [vmem:[#allocation9 + $0x2c] sm:$0xf]
        %v615 = vld [vmem:[#allocation9 + $0x30] sm:$0xf]
        %v616 = vld [vmem:[#allocation9 + $0x34] sm:$0xf]
        %v617 = vld [vmem:[#allocation9 + $0x38] sm:$0xf]
        %v618 = vld [vmem:[#allocation9 + $0x3c] sm:$0xf]
        %v619 = vld [vmem:[%s376] sm:$0x1]
        %v621 = vlaneseq
        %v622 = vshrl.u32 %v621, 7
        %v623 = vsub.s32 0, %v622
        %v624 = vrot.slane %v619, %v623
        %v628 = vunpack.c.l.b16 %v601
        %v629 = vunpack.c.l.b16 %v602
        %v630 = vpack.c.b16 %v629, %v628
        %v648 = vunpack.c.l.b16 %v603
        %v649 = vunpack.c.l.b16 %v604
        %v650 = vunpack.c.l.b16 %v605
        %v651 = vunpack.c.l.b16 %v606
        %v652 = vunpack.c.l.b16 %v607
        %v653 = vunpack.c.l.b16 %v608
        %v654 = vunpack.c.l.b16 %v609
        %v655 = vunpack.c.l.b16 %v610
        %v656 = vunpack.c.l.b16 %v611
        %v657 = vunpack.c.l.b16 %v612
        %v658 = vunpack.c.l.b16 %v613
        %v659 = vunpack.c.l.b16 %v614
        %v660 = vunpack.c.l.b16 %v615
        %v661 = vunpack.c.l.b16 %v616
        %v662 = vunpack.c.l.b16 %v617
        %v663 = vunpack.c.l.b16 %v618
        %v664 = vpack.c.b16 %v649, %v648
        %v665 = vpack.c.b16 %v651, %v650
        %v666 = vpack.c.b16 %v653, %v652
        %v667 = vpack.c.b16 %v655, %v654
        %v668 = vpack.c.b16 %v657, %v656
        %v669 = vpack.c.b16 %v659, %v658
        %v670 = vpack.c.b16 %v661, %v660
        %v671 = vpack.c.b16 %v663, %v662
        %680 = vmatprep.subr.bf16.mxu0 0
        %681 = vmatpush1.bf16.msra.mxu0 %v671
        %682 = vmatprep.subr.bf16.mxu0 0
        %683 = vmatpush1.bf16.msra.mxu0 %v670
        %684 = vmatprep.subr.bf16.mxu0 0
        %685 = vmatpush1.bf16.msra.mxu0 %v669
        %686 = vmatprep.subr.bf16.mxu0 0
        %687 = vmatpush1.bf16.msra.mxu0 %v668
        %688 = vmatprep.subr.bf16.mxu0 0
        %689 = vmatpush1.bf16.msra.mxu0 %v667
        %690 = vmatprep.subr.bf16.mxu0 0
        %691 = vmatpush1.bf16.msra.mxu0 %v666
        %692 = vmatprep.subr.bf16.mxu0 0
        %693 = vmatpush1.bf16.msra.mxu0 %v665
        %694 = vmatprep.subr.bf16.mxu0 0
        %695 = vmatpush1.bf16.msra.mxu0 %v664
        %696 = vmatprep.subr.bf16.mxu0 0
        %697 = vmatpush2.bf16.msra.mxu0 0
        %698 = vmatprep.subr.bf16.mxu0 0
        %699 = vmatpush2.bf16.msra.mxu0 0
        %700 = vmatprep.subr.bf16.mxu0 0
        %701 = vmatpush2.bf16.msra.mxu0 0
        %702 = vmatprep.subr.bf16.mxu0 0
        %703 = vmatpush2.bf16.msra.mxu0 0
        %704 = vmatprep.subr.bf16.mxu0 0
        %705 = vmatpush2.bf16.msra.mxu0 0
        %706 = vmatprep.subr.bf16.mxu0 0
        %707 = vmatpush2.bf16.msra.mxu0 0
        %708 = vmatprep.subr.bf16.mxu0 0
        %709 = vmatpush2.bf16.msra.mxu0 0
        %710 = vmatprep.subr.bf16.mxu0 0
        %711 = vmatpush2.bf16.msra.mxu0 0
        %712 = vmatprep.mubr.bf16.mxu0 0
        %713 = vmatmul.mubr.bf16.gmra.mxu0 %v630
        %v714 = vpop.f32.mrf.mxu0
        %v715 = vadd.f32 %v624, %v714
        %v716 = vpop.f32.mrf.mxu0
        %v717 = vpop.f32.mrf.mxu0
        %v718 = vadd.f32 %v624, %v717
        %v719 = vpop.f32.mrf.mxu0
        %720 = vdwg.mxu0
        %721 = vst [vmem:[%s372] sm:$0xff] %v715
        %722 = vst [vmem:[%s372 + $0x8] sm:$0xff] %v718
        %s723 = sand.u32 %s210, 1
        %s724 = scalar_lea.sflag [#allocation5], %s723
        %s725 = sand.u32 %s210, 1
        %s726 = smul.addr %s725, 16
        %s727 = scalar_lea.vmem [#allocation11], %s726
        // Predicated region
        $region69: #{tpu_custom_call.1} parent=47 // pred_check
          %p728 = pneg %p220
        $region70: #{tpu_custom_call.1} parent=47 // pred_check_branch
          %730 = sbr.rel (%p728) target = $region72
        $region71: #{tpu_custom_call.1} parent=47 // pred_region
          %s731 = smul.u32 2, %s30
          %s733 = ssub.s32 256, 256
          %734 = vsyncadd %s724, %s733
          %s735 = sadd.s32 %s31, %s731
          %s736 = smul.addr %s735, 128
          %s737 = scalar_lea.hbm %s7, %s736
          %s738 = sshll.u32 %s727, 4
          %s739 = int_to_ptr.vmem [resolvable:$true] %s738
          %744 = dma.vmem_to_hbm [thread:$0]  %s739, 256, %s737, %s724, 128, 128, 8
        $region72: #{tpu_custom_call.1} parent=47 // pred_fallthru
          _
      $region48: #{tpu_custom_call.1} parent=5 // pred_fallthru
        _
      %p745 = scmp.le.s32.totalorder 2, %s21
      // Predicated region
      $region73: #{tpu_custom_call.1} parent=5 // pred_check
        %p746 = pneg %p745
      $region74: #{tpu_custom_call.1} parent=5 // pred_check_branch
        %748 = sbr.rel (%p746) target = $region76
      $region75: #{tpu_custom_call.1} parent=5 // pred_region
        %s749 = ssub.s32 %s21, 2
        // Predicated region
        $region77: #{tpu_custom_call.1} parent=75 // pred_check
          %p750 = pneg %p226
        $region78: #{tpu_custom_call.1} parent=75 // pred_check_branch
          %752 = sbr.rel (%p750) target = $region80
        $region79: #{tpu_custom_call.1} parent=75 // pred_region
          %s753 = sand.u32 %s211, 1
          %s754 = scalar_lea.sflag [#allocation5], %s753
          %s755 = sand.u32 %s211, 1
          %s756 = smul.addr %s755, 16
          %s757 = scalar_lea.vmem [#allocation11], %s756
          %758 = dma.done %s754, 256
        $region80: #{tpu_custom_call.1} parent=75 // pred_fallthru
          _
      $region76: #{tpu_custom_call.1} parent=5 // pred_fallthru
        _
    $region6: #{tpu_custom_call.1} parent=1 // loop_footer
      %s25 = sadd.s32 1, %s21
    $region7: #{tpu_custom_call.1} parent=1 // loop_footer_branch
      %20 = sbr.rel target = $region3
    $region8: #{tpu_custom_call.1} parent=1 // loop_exit
      _
    %759 = vsyncpa [#allocation4], 1
    %s760 = scalar_lea.sflag [#allocation4], 1
    %761 = vsyncpa %s760, 1
    %762 = vsyncpa [#allocation7], 1
    %763 = vsyncpa [#allocation10], 1
    %764 = vsyncpa [#allocation5], 1
    %s765 = scalar_lea.sflag [#allocation5], 1
    %766 = vsyncpa %s765, 1

</llo_original>
